<compile_context>
chip_gen: v6e
topology: v6e:2x2x1
jax: 0.10.0
libtpu: 0.0.40
codegen_flags: <defaults>
</compile_context>

<pallas_src>
import functools

import jax
import jax.numpy as jnp
from jax import lax
from jax.experimental import pallas as pl
from jax.experimental.pallas import tpu as pltpu  # noqa: F401  (TPU backend)


# -----------------------------------------------------------------------------
# In-kernel LSTM cell (PyTorch gate order i, f, g, o), fused input/recurrent W.
# -----------------------------------------------------------------------------
def _lstm_cell(x, h, c, w_ref, b_ref, hidden_dim):
    H = hidden_dim
    # Single MXU push: [x | h] (B, D+H) @ W (D+H, 4H).
    xh = jnp.concatenate([x, h], axis=-1)
    gates = (jnp.dot(xh, w_ref[...], preferred_element_type=jnp.float32)
             + b_ref[...])
    # NOTE: with production H >= 128 these gate slices become lane-tile
    # aligned (free vreg views); at the tiny test H=32 they are masked but
    # still correct.
    i_g = jax.nn.sigmoid(gates[:, 0 * H:1 * H])
    f_g = jax.nn.sigmoid(gates[:, 1 * H:2 * H])
    g_g = jnp.tanh(gates[:, 2 * H:3 * H])
    o_g = jax.nn.sigmoid(gates[:, 3 * H:4 * H])
    c_new = f_g * c + i_g * g_g
    h_new = o_g * jnp.tanh(c_new)
    return h_new, c_new


# -----------------------------------------------------------------------------
# Pallas kernels
# -----------------------------------------------------------------------------
def _bilstm_seq_kernel(x_ref, wf_ref, bf_ref, wb_ref, bb_ref, out_ref,
                       *, hidden_dim, seq_len):
    """Intermediate bi-LSTM layer: full time loop in-kernel, both directions
    fused, writes the concatenated [T, B, 2H] hidden sequence directly."""
    H = hidden_dim
    T = seq_len
    B = x_ref.shape[1]

    def step(t, carry):
        h_f, c_f, h_b, c_b = carry
        # Forward direction processes time t.
        h_f, c_f = _lstm_cell(x_ref[t], h_f, c_f, wf_ref, bf_ref, H)
        out_ref[t, :, 0:H] = h_f
        # Backward direction processes time T-1-t (reversal via indexing,
        # output lands already un-reversed in lanes [H:2H]).
        tb = T - 1 - t
        h_b, c_b = _lstm_cell(x_ref[tb], h_b, c_b, wb_ref, bb_ref, H)
        out_ref[tb, :, H:2 * H] = h_b
        return h_f, c_f, h_b, c_b

    z = jnp.zeros((B, H), jnp.float32)
    lax.fori_loop(0, T, step, (z, z, z, z), unroll=True)


def _bilstm_final_kernel(x_ref, wf_ref, bf_ref, wb_ref, bb_ref,
                         fcw_ref, fcb_ref, out_ref, *, hidden_dim, seq_len):
    """Last bi-LSTM layer fused with the FC head: keeps only the final
    forward/backward hidden states and emits logits [B, output_dim]."""
    H = hidden_dim
    T = seq_len
    B = x_ref.shape[1]

    def step(t, carry):
        h_f, c_f, h_b, c_b = carry
        h_f, c_f = _lstm_cell(x_ref[t], h_f, c_f, wf_ref, bf_ref, H)
        h_b, c_b = _lstm_cell(x_ref[T - 1 - t], h_b, c_b, wb_ref, bb_ref, H)
        return h_f, c_f, h_b, c_b

    z = jnp.zeros((B, H), jnp.float32)
    h_f, _, h_b, _ = lax.fori_loop(0, T, step, (z, z, z, z), unroll=True)

    # hidden_cat = cat(hidden[-2], hidden[-1]); FC fused into the same kernel.
    hidden_cat = jnp.concatenate([h_f, h_b], axis=-1)            # (B, 2H)
    out_ref[...] = (jnp.dot(hidden_cat, fcw_ref[...],
                            preferred_element_type=jnp.float32)
                    + fcb_ref[...])


# -----------------------------------------------------------------------------
# Wrappers (grid=(): whole sequence + weights resident in VMEM; at production
# T*B*D sizes switch to a T-chunked grid and re-derive the VMEM budget,
# especially on v7x's 64 MiB VMEM).
# -----------------------------------------------------------------------------
def run_bilstm_layer(x_tbd, layer_p):
    T, B, _ = x_tbd.shape
    H = layer_p["fwd"]["w"].shape[1] // 4
    kernel = functools.partial(_bilstm_seq_kernel, hidden_dim=H, seq_len=T)
    return pl.pallas_call(
        kernel,
        out_shape=jax.ShapeDtypeStruct((T, B, 2 * H), jnp.float32),
    )(x_tbd,
      layer_p["fwd"]["w"], layer_p["fwd"]["b"],
      layer_p["bwd"]["w"], layer_p["bwd"]["b"])


def run_bilstm_final(x_tbd, layer_p, fc_wt, fc_b):
    T, B, _ = x_tbd.shape
    H = layer_p["fwd"]["w"].shape[1] // 4
    O = fc_wt.shape[1]
    kernel = functools.partial(_bilstm_final_kernel, hidden_dim=H, seq_len=T)
    return pl.pallas_call(
        kernel,
        out_shape=jax.ShapeDtypeStruct((B, O), jnp.float32),
    )(x_tbd,
      layer_p["fwd"]["w"], layer_p["fwd"]["b"],
      layer_p["bwd"]["w"], layer_p["bwd"]["b"],
      fc_wt, fc_b)


def bi_stacked_lstm_classifier(text, params):
    """Forward pass matching BiStackedLSTMClassifier.forward.

    text: [B, T] int32 token ids.
    returns: [B, output_dim] float32 logits.
    """
    B, T = text.shape
    fc_wt, fc_b = params["fc_wt"], params["fc_b"]
    if T == 0:
        return jnp.zeros((B, fc_wt.shape[1]), jnp.float32)

    # Time-major embedding gather directly: [T, B, E] (no transpose pass).
    # TODO(synk): the gather itself stays in plain JAX; fusing it into the
    # kernel would need scalar-prefetched token ids + Element-indexed specs.
    x = jnp.take(params["embedding"], text.T, axis=0).astype(jnp.float32)

    layers = params["lstm_layers"]
    for layer in layers[:-1]:
        x = run_bilstm_layer(x, layer)                      # [T, B, 2H]
    return run_bilstm_final(x, layers[-1], fc_wt, fc_b)     # [B, O]


# -----------------------------------------------------------------------------
# Deterministic parameter initialization (PyTorch shapes, fused & transposed)
# -----------------------------------------------------------------------------
def init_params(key, vocab_size, embedding_dim, hidden_dim, output_dim,
                padding_idx, num_layers=2):
    keys = iter(jax.random.split(key, 64))
    scale = 0.1

    emb = scale * jax.random.normal(next(keys), (vocab_size, embedding_dim),
                                    jnp.float32)
    emb = emb.at[padding_idx].set(0.0)

    layers = []
    for layer in range(num_layers):
        in_dim = embedding_dim if layer == 0 else 2 * hidden_dim
        layer_p = {}
        for direction in ("fwd", "bwd"):
            w_ih = scale * jax.random.normal(next(keys),
                                             (4 * hidden_dim, in_dim),
                                             jnp.float32)
            w_hh = scale * jax.random.normal(next(keys),
                                             (4 * hidden_dim, hidden_dim),
                                             jnp.float32)
            b_ih = scale * jax.random.normal(next(keys), (4 * hidden_dim,),
                                             jnp.float32)
            b_hh = scale * jax.random.normal(next(keys), (4 * hidden_dim,),
                                             jnp.float32)
            layer_p[direction] = {
                # Fused [W_ih^T ; W_hh^T]: (in_dim + H, 4H).
                "w": jnp.concatenate([w_ih.T, w_hh.T], axis=0),
                # Fused bias (1, 4H).
                "b": (b_ih + b_hh)[None, :],
            }
        layers.append(layer_p)

    fc_w = scale * jax.random.normal(next(keys),
                                     (output_dim, 2 * hidden_dim), jnp.float32)
    fc_b = scale * jax.random.normal(next(keys), (output_dim,), jnp.float32)

    return {
        "embedding": emb,
        "lstm_layers": layers,
        "fc_wt": fc_w.T,            # (2H, O)
        "fc_b": fc_b[None, :],      # (1, O)
    }


# -----------------------------------------------------------------------------
# Main
# -----------------------------------------------------------------------------
if __name__ == "__main__":
    VOCAB, EMB, HID, OUT, PAD = 20, 16, 32, 4, 0
    B, T = 2, 8

    key = jax.random.PRNGKey(0)
    k_param, k_text = jax.random.split(key)
    params = init_params(k_param, VOCAB, EMB, HID, OUT, PAD, num_layers=2)
    text = jax.random.randint(k_text, (B, T), 0, VOCAB, dtype=jnp.int32)

    logits = bi_stacked_lstm_classifier(text, params)
    jax.block_until_ready(logits)
    assert logits.shape == (B, OUT)
    print("KERNEL_OK")
</pallas_src>

<mosaic_0001>
module attributes {stable_mosaic.version = 11 : i64} {
  func.func @_bilstm_seq_kernel(%arg0: memref<8x2x16xf32, #tpu.memory_space<vmem>>, %arg1: memref<48x128xf32, #tpu.memory_space<vmem>>, %arg2: memref<1x128xf32, #tpu.memory_space<vmem>>, %arg3: memref<48x128xf32, #tpu.memory_space<vmem>>, %arg4: memref<1x128xf32, #tpu.memory_space<vmem>>, %arg5: memref<8x2x64xf32, #tpu.memory_space<vmem>>) attributes {dimension_semantics = [], scalar_prefetch = 0 : i64, scratch_operands = 0 : i64, tpu.core_type = #tpu.core_type<tc>} {
    %cst = arith.constant 0.000000e+00 : f32
    %0 = vector.broadcast %cst : f32 to vector<2x32xf32>
    %c0_i32 = arith.constant 0 : i32
    %1 = arith.index_cast %c0_i32 : i32 to index
    %c0 = arith.constant 0 : index
    %c0_0 = arith.constant 0 : index
    %2 = vector.load %arg0[%1, %c0, %c0_0] : memref<8x2x16xf32, #tpu.memory_space<vmem>>, vector<1x2x16xf32>
    %3 = vector.shape_cast %2 : vector<1x2x16xf32> to vector<2x16xf32>
    %4 = tpu.concatenate %3, %0 in 1 : vector<2x16xf32>, vector<2x32xf32> -> vector<2x48xf32>
    %c0_1 = arith.constant 0 : index
    %c0_2 = arith.constant 0 : index
    %5 = vector.load %arg1[%c0_1, %c0_2] : memref<48x128xf32, #tpu.memory_space<vmem>>, vector<48x128xf32>
    %cst_3 = arith.constant dense<0.000000e+00> : vector<2x128xf32>
    %6 = tpu.matmul %4, %5, %cst_3 {dimension_numbers = #tpu.dot_dimension_numbers<[1], [0], [0], [1], [0, 0, 1, 1], [], []>} : vector<2x48xf32>, vector<48x128xf32>, vector<2x128xf32> -> vector<2x128xf32>
    %c0_4 = arith.constant 0 : index
    %c0_5 = arith.constant 0 : index
    %7 = vector.load %arg2[%c0_4, %c0_5] : memref<1x128xf32, #tpu.memory_space<vmem>>, vector<1x128xf32>
    %8 = vector.broadcast %7 : vector<1x128xf32> to vector<2x128xf32>
    %9 = arith.addf %6, %8 : vector<2x128xf32>
    %10 = vector.extract_strided_slice %9 {offsets = [0, 0], sizes = [2, 32], strides = [1, 1]} : vector<2x128xf32> to vector<2x32xf32>
    %11 = arith.negf %10 : vector<2x32xf32>
    %12 = math.exp %11 : vector<2x32xf32>
    %cst_6 = arith.constant 1.000000e+00 : f32
    %13 = vector.broadcast %cst_6 : f32 to vector<2x32xf32>
    %14 = arith.addf %13, %12 : vector<2x32xf32>
    %15 = arith.divf %13, %14 : vector<2x32xf32>
    %16 = vector.extract_strided_slice %9 {offsets = [0, 32], sizes = [2, 32], strides = [1, 1]} : vector<2x128xf32> to vector<2x32xf32>
    %17 = arith.negf %16 : vector<2x32xf32>
    %18 = math.exp %17 : vector<2x32xf32>
    %cst_7 = arith.constant 1.000000e+00 : f32
    %19 = vector.broadcast %cst_7 : f32 to vector<2x32xf32>
    %20 = arith.addf %19, %18 : vector<2x32xf32>
    %21 = arith.divf %19, %20 : vector<2x32xf32>
    %22 = vector.extract_strided_slice %9 {offsets = [0, 64], sizes = [2, 32], strides = [1, 1]} : vector<2x128xf32> to vector<2x32xf32>
    %23 = math.tanh %22 : vector<2x32xf32>
    %24 = vector.extract_strided_slice %9 {offsets = [0, 96], sizes = [2, 32], strides = [1, 1]} : vector<2x128xf32> to vector<2x32xf32>
    %25 = arith.negf %24 : vector<2x32xf32>
    %26 = math.exp %25 : vector<2x32xf32>
    %cst_8 = arith.constant 1.000000e+00 : f32
    %27 = vector.broadcast %cst_8 : f32 to vector<2x32xf32>
    %28 = arith.addf %27, %26 : vector<2x32xf32>
    %29 = arith.divf %27, %28 : vector<2x32xf32>
    %30 = arith.mulf %21, %0 : vector<2x32xf32>
    %31 = arith.mulf %15, %23 : vector<2x32xf32>
    %32 = arith.addf %30, %31 : vector<2x32xf32>
    %33 = math.tanh %32 : vector<2x32xf32>
    %34 = arith.mulf %29, %33 : vector<2x32xf32>
    %35 = arith.index_cast %c0_i32 : i32 to index
    %c0_9 = arith.constant 0 : index
    %c0_10 = arith.constant 0 : index
    %36 = vector.load %arg5[%35, %c0_9, %c0_10] : memref<8x2x64xf32, #tpu.memory_space<vmem>>, vector<1x2x32xf32>
    %37 = vector.shape_cast %36 : vector<1x2x32xf32> to vector<2x32xf32>
    %38 = vector.shape_cast %34 : vector<2x32xf32> to vector<1x2x32xf32>
    tpu.vector_store %arg5[%35, %c0_9, %c0_10], %38 {strides = array<i32>} : memref<8x2x64xf32, #tpu.memory_space<vmem>>, vector<1x2x32xf32>,
    %c7_i32 = arith.constant 7 : i32
    %39 = arith.subi %c7_i32, %c0_i32 : i32
    %40 = arith.index_cast %39 : i32 to index
    %c0_11 = arith.constant 0 : index
    %c0_12 = arith.constant 0 : index
    %41 = vector.load %arg0[%40, %c0_11, %c0_12] : memref<8x2x16xf32, #tpu.memory_space<vmem>>, vector<1x2x16xf32>
    %42 = vector.shape_cast %41 : vector<1x2x16xf32> to vector<2x16xf32>
    %43 = tpu.concatenate %42, %0 in 1 : vector<2x16xf32>, vector<2x32xf32> -> vector<2x48xf32>
    %c0_13 = arith.constant 0 : index
    %c0_14 = arith.constant 0 : index
    %44 = vector.load %arg3[%c0_13, %c0_14] : memref<48x128xf32, #tpu.memory_space<vmem>>, vector<48x128xf32>
    %cst_15 = arith.constant dense<0.000000e+00> : vector<2x128xf32>
    %45 = tpu.matmul %43, %44, %cst_15 {dimension_numbers = #tpu.dot_dimension_numbers<[1], [0], [0], [1], [0, 0, 1, 1], [], []>} : vector<2x48xf32>, vector<48x128xf32>, vector<2x128xf32> -> vector<2x128xf32>
    %c0_16 = arith.constant 0 : index
    %c0_17 = arith.constant 0 : index
    %46 = vector.load %arg4[%c0_16, %c0_17] : memref<1x128xf32, #tpu.memory_space<vmem>>, vector<1x128xf32>
    %47 = vector.broadcast %46 : vector<1x128xf32> to vector<2x128xf32>
    %48 = arith.addf %45, %47 : vector<2x128xf32>
    %49 = vector.extract_strided_slice %48 {offsets = [0, 0], sizes = [2, 32], strides = [1, 1]} : vector<2x128xf32> to vector<2x32xf32>
    %50 = arith.negf %49 : vector<2x32xf32>
    %51 = math.exp %50 : vector<2x32xf32>
    %cst_18 = arith.constant 1.000000e+00 : f32
    %52 = vector.broadcast %cst_18 : f32 to vector<2x32xf32>
    %53 = arith.addf %52, %51 : vector<2x32xf32>
    %54 = arith.divf %52, %53 : vector<2x32xf32>
    %55 = vector.extract_strided_slice %48 {offsets = [0, 32], sizes = [2, 32], strides = [1, 1]} : vector<2x128xf32> to vector<2x32xf32>
    %56 = arith.negf %55 : vector<2x32xf32>
    %57 = math.exp %56 : vector<2x32xf32>
    %cst_19 = arith.constant 1.000000e+00 : f32
    %58 = vector.broadcast %cst_19 : f32 to vector<2x32xf32>
    %59 = arith.addf %58, %57 : vector<2x32xf32>
    %60 = arith.divf %58, %59 : vector<2x32xf32>
    %61 = vector.extract_strided_slice %48 {offsets = [0, 64], sizes = [2, 32], strides = [1, 1]} : vector<2x128xf32> to vector<2x32xf32>
    %62 = math.tanh %61 : vector<2x32xf32>
    %63 = vector.extract_strided_slice %48 {offsets = [0, 96], sizes = [2, 32], strides = [1, 1]} : vector<2x128xf32> to vector<2x32xf32>
    %64 = arith.negf %63 : vector<2x32xf32>
    %65 = math.exp %64 : vector<2x32xf32>
    %cst_20 = arith.constant 1.000000e+00 : f32
    %66 = vector.broadcast %cst_20 : f32 to vector<2x32xf32>
    %67 = arith.addf %66, %65 : vector<2x32xf32>
    %68 = arith.divf %66, %67 : vector<2x32xf32>
    %69 = arith.mulf %60, %0 : vector<2x32xf32>
    %70 = arith.mulf %54, %62 : vector<2x32xf32>
    %71 = arith.addf %69, %70 : vector<2x32xf32>
    %72 = math.tanh %71 : vector<2x32xf32>
    %73 = arith.mulf %68, %72 : vector<2x32xf32>
    %74 = arith.index_cast %39 : i32 to index
    %c0_21 = arith.constant 0 : index
    %c32 = arith.constant 32 : index
    %75 = vector.load %arg5[%74, %c0_21, %c32] : memref<8x2x64xf32, #tpu.memory_space<vmem>>, vector<1x2x32xf32>
    %76 = vector.shape_cast %75 : vector<1x2x32xf32> to vector<2x32xf32>
    %77 = vector.shape_cast %73 : vector<2x32xf32> to vector<1x2x32xf32>
    tpu.vector_store %arg5[%74, %c0_21, %c32], %77 {strides = array<i32>} : memref<8x2x64xf32, #tpu.memory_space<vmem>>, vector<1x2x32xf32>,
    %c1_i32 = arith.constant 1 : i32
    %78 = arith.index_cast %c1_i32 : i32 to index
    %c0_22 = arith.constant 0 : index
    %c0_23 = arith.constant 0 : index
    %79 = vector.load %arg0[%78, %c0_22, %c0_23] : memref<8x2x16xf32, #tpu.memory_space<vmem>>, vector<1x2x16xf32>
    %80 = vector.shape_cast %79 : vector<1x2x16xf32> to vector<2x16xf32>
    %81 = tpu.concatenate %80, %34 in 1 : vector<2x16xf32>, vector<2x32xf32> -> vector<2x48xf32>
    %c0_24 = arith.constant 0 : index
    %c0_25 = arith.constant 0 : index
    %82 = vector.load %arg1[%c0_24, %c0_25] : memref<48x128xf32, #tpu.memory_space<vmem>>, vector<48x128xf32>
    %cst_26 = arith.constant dense<0.000000e+00> : vector<2x128xf32>
    %83 = tpu.matmul %81, %82, %cst_26 {dimension_numbers = #tpu.dot_dimension_numbers<[1], [0], [0], [1], [0, 0, 1, 1], [], []>} : vector<2x48xf32>, vector<48x128xf32>, vector<2x128xf32> -> vector<2x128xf32>
    %c0_27 = arith.constant 0 : index
    %c0_28 = arith.constant 0 : index
    %84 = vector.load %arg2[%c0_27, %c0_28] : memref<1x128xf32, #tpu.memory_space<vmem>>, vector<1x128xf32>
    %85 = vector.broadcast %84 : vector<1x128xf32> to vector<2x128xf32>
    %86 = arith.addf %83, %85 : vector<2x128xf32>
    %87 = vector.extract_strided_slice %86 {offsets = [0, 0], sizes = [2, 32], strides = [1, 1]} : vector<2x128xf32> to vector<2x32xf32>
    %88 = arith.negf %87 : vector<2x32xf32>
    %89 = math.exp %88 : vector<2x32xf32>
    %cst_29 = arith.constant 1.000000e+00 : f32
    %90 = vector.broadcast %cst_29 : f32 to vector<2x32xf32>
    %91 = arith.addf %90, %89 : vector<2x32xf32>
    %92 = arith.divf %90, %91 : vector<2x32xf32>
    %93 = vector.extract_strided_slice %86 {offsets = [0, 32], sizes = [2, 32], strides = [1, 1]} : vector<2x128xf32> to vector<2x32xf32>
    %94 = arith.negf %93 : vector<2x32xf32>
    %95 = math.exp %94 : vector<2x32xf32>
    %cst_30 = arith.constant 1.000000e+00 : f32
    %96 = vector.broadcast %cst_30 : f32 to vector<2x32xf32>
    %97 = arith.addf %96, %95 : vector<2x32xf32>
    %98 = arith.divf %96, %97 : vector<2x32xf32>
    %99 = vector.extract_strided_slice %86 {offsets = [0, 64], sizes = [2, 32], strides = [1, 1]} : vector<2x128xf32> to vector<2x32xf32>
    %100 = math.tanh %99 : vector<2x32xf32>
    %101 = vector.extract_strided_slice %86 {offsets = [0, 96], sizes = [2, 32], strides = [1, 1]} : vector<2x128xf32> to vector<2x32xf32>
    %102 = arith.negf %101 : vector<2x32xf32>
    %103 = math.exp %102 : vector<2x32xf32>
    %cst_31 = arith.constant 1.000000e+00 : f32
    %104 = vector.broadcast %cst_31 : f32 to vector<2x32xf32>
    %105 = arith.addf %104, %103 : vector<2x32xf32>
    %106 = arith.divf %104, %105 : vector<2x32xf32>
    %107 = arith.mulf %98, %32 : vector<2x32xf32>
    %108 = arith.mulf %92, %100 : vector<2x32xf32>
    %109 = arith.addf %107, %108 : vector<2x32xf32>
    %110 = math.tanh %109 : vector<2x32xf32>
    %111 = arith.mulf %106, %110 : vector<2x32xf32>
    %112 = arith.index_cast %c1_i32 : i32 to index
    %c0_32 = arith.constant 0 : index
    %c0_33 = arith.constant 0 : index
    %113 = vector.load %arg5[%112, %c0_32, %c0_33] : memref<8x2x64xf32, #tpu.memory_space<vmem>>, vector<1x2x32xf32>
    %114 = vector.shape_cast %113 : vector<1x2x32xf32> to vector<2x32xf32>
    %115 = vector.shape_cast %111 : vector<2x32xf32> to vector<1x2x32xf32>
    tpu.vector_store %arg5[%112, %c0_32, %c0_33], %115 {strides = array<i32>} : memref<8x2x64xf32, #tpu.memory_space<vmem>>, vector<1x2x32xf32>,
    %c7_i32_34 = arith.constant 7 : i32
    %116 = arith.subi %c7_i32_34, %c1_i32 : i32
    %117 = arith.index_cast %116 : i32 to index
    %c0_35 = arith.constant 0 : index
    %c0_36 = arith.constant 0 : index
    %118 = vector.load %arg0[%117, %c0_35, %c0_36] : memref<8x2x16xf32, #tpu.memory_space<vmem>>, vector<1x2x16xf32>
    %119 = vector.shape_cast %118 : vector<1x2x16xf32> to vector<2x16xf32>
    %120 = tpu.concatenate %119, %73 in 1 : vector<2x16xf32>, vector<2x32xf32> -> vector<2x48xf32>
    %c0_37 = arith.constant 0 : index
    %c0_38 = arith.constant 0 : index
    %121 = vector.load %arg3[%c0_37, %c0_38] : memref<48x128xf32, #tpu.memory_space<vmem>>, vector<48x128xf32>
    %cst_39 = arith.constant dense<0.000000e+00> : vector<2x128xf32>
    %122 = tpu.matmul %120, %121, %cst_39 {dimension_numbers = #tpu.dot_dimension_numbers<[1], [0], [0], [1], [0, 0, 1, 1], [], []>} : vector<2x48xf32>, vector<48x128xf32>, vector<2x128xf32> -> vector<2x128xf32>
    %c0_40 = arith.constant 0 : index
    %c0_41 = arith.constant 0 : index
    %123 = vector.load %arg4[%c0_40, %c0_41] : memref<1x128xf32, #tpu.memory_space<vmem>>, vector<1x128xf32>
    %124 = vector.broadcast %123 : vector<1x128xf32> to vector<2x128xf32>
    %125 = arith.addf %122, %124 : vector<2x128xf32>
    %126 = vector.extract_strided_slice %125 {offsets = [0, 0], sizes = [2, 32], strides = [1, 1]} : vector<2x128xf32> to vector<2x32xf32>
    %127 = arith.negf %126 : vector<2x32xf32>
    %128 = math.exp %127 : vector<2x32xf32>
    %cst_42 = arith.constant 1.000000e+00 : f32
    %129 = vector.broadcast %cst_42 : f32 to vector<2x32xf32>
    %130 = arith.addf %129, %128 : vector<2x32xf32>
    %131 = arith.divf %129, %130 : vector<2x32xf32>
    %132 = vector.extract_strided_slice %125 {offsets = [0, 32], sizes = [2, 32], strides = [1, 1]} : vector<2x128xf32> to vector<2x32xf32>
    %133 = arith.negf %132 : vector<2x32xf32>
    %134 = math.exp %133 : vector<2x32xf32>
    %cst_43 = arith.constant 1.000000e+00 : f32
    %135 = vector.broadcast %cst_43 : f32 to vector<2x32xf32>
    %136 = arith.addf %135, %134 : vector<2x32xf32>
    %137 = arith.divf %135, %136 : vector<2x32xf32>
    %138 = vector.extract_strided_slice %125 {offsets = [0, 64], sizes = [2, 32], strides = [1, 1]} : vector<2x128xf32> to vector<2x32xf32>
    %139 = math.tanh %138 : vector<2x32xf32>
    %140 = vector.extract_strided_slice %125 {offsets = [0, 96], sizes = [2, 32], strides = [1, 1]} : vector<2x128xf32> to vector<2x32xf32>
    %141 = arith.negf %140 : vector<2x32xf32>
    %142 = math.exp %141 : vector<2x32xf32>
    %cst_44 = arith.constant 1.000000e+00 : f32
    %143 = vector.broadcast %cst_44 : f32 to vector<2x32xf32>
    %144 = arith.addf %143, %142 : vector<2x32xf32>
    %145 = arith.divf %143, %144 : vector<2x32xf32>
    %146 = arith.mulf %137, %71 : vector<2x32xf32>
    %147 = arith.mulf %131, %139 : vector<2x32xf32>
    %148 = arith.addf %146, %147 : vector<2x32xf32>
    %149 = math.tanh %148 : vector<2x32xf32>
    %150 = arith.mulf %145, %149 : vector<2x32xf32>
    %151 = arith.index_cast %116 : i32 to index
    %c0_45 = arith.constant 0 : index
    %c32_46 = arith.constant 32 : index
    %152 = vector.load %arg5[%151, %c0_45, %c32_46] : memref<8x2x64xf32, #tpu.memory_space<vmem>>, vector<1x2x32xf32>
    %153 = vector.shape_cast %152 : vector<1x2x32xf32> to vector<2x32xf32>
    %154 = vector.shape_cast %150 : vector<2x32xf32> to vector<1x2x32xf32>
    tpu.vector_store %arg5[%151, %c0_45, %c32_46], %154 {strides = array<i32>} : memref<8x2x64xf32, #tpu.memory_space<vmem>>, vector<1x2x32xf32>,
    %c2_i32 = arith.constant 2 : i32
    %155 = arith.index_cast %c2_i32 : i32 to index
    %c0_47 = arith.constant 0 : index
    %c0_48 = arith.constant 0 : index
    %156 = vector.load %arg0[%155, %c0_47, %c0_48] : memref<8x2x16xf32, #tpu.memory_space<vmem>>, vector<1x2x16xf32>
    %157 = vector.shape_cast %156 : vector<1x2x16xf32> to vector<2x16xf32>
    %158 = tpu.concatenate %157, %111 in 1 : vector<2x16xf32>, vector<2x32xf32> -> vector<2x48xf32>
    %c0_49 = arith.constant 0 : index
    %c0_50 = arith.constant 0 : index
    %159 = vector.load %arg1[%c0_49, %c0_50] : memref<48x128xf32, #tpu.memory_space<vmem>>, vector<48x128xf32>
    %cst_51 = arith.constant dense<0.000000e+00> : vector<2x128xf32>
    %160 = tpu.matmul %158, %159, %cst_51 {dimension_numbers = #tpu.dot_dimension_numbers<[1], [0], [0], [1], [0, 0, 1, 1], [], []>} : vector<2x48xf32>, vector<48x128xf32>, vector<2x128xf32> -> vector<2x128xf32>
    %c0_52 = arith.constant 0 : index
    %c0_53 = arith.constant 0 : index
    %161 = vector.load %arg2[%c0_52, %c0_53] : memref<1x128xf32, #tpu.memory_space<vmem>>, vector<1x128xf32>
    %162 = vector.broadcast %161 : vector<1x128xf32> to vector<2x128xf32>
    %163 = arith.addf %160, %162 : vector<2x128xf32>
    %164 = vector.extract_strided_slice %163 {offsets = [0, 0], sizes = [2, 32], strides = [1, 1]} : vector<2x128xf32> to vector<2x32xf32>
    %165 = arith.negf %164 : vector<2x32xf32>
    %166 = math.exp %165 : vector<2x32xf32>
    %cst_54 = arith.constant 1.000000e+00 : f32
    %167 = vector.broadcast %cst_54 : f32 to vector<2x32xf32>
    %168 = arith.addf %167, %166 : vector<2x32xf32>
    %169 = arith.divf %167, %168 : vector<2x32xf32>
    %170 = vector.extract_strided_slice %163 {offsets = [0, 32], sizes = [2, 32], strides = [1, 1]} : vector<2x128xf32> to vector<2x32xf32>
    %171 = arith.negf %170 : vector<2x32xf32>
    %172 = math.exp %171 : vector<2x32xf32>
    %cst_55 = arith.constant 1.000000e+00 : f32
    %173 = vector.broadcast %cst_55 : f32 to vector<2x32xf32>
    %174 = arith.addf %173, %172 : vector<2x32xf32>
    %175 = arith.divf %173, %174 : vector<2x32xf32>
    %176 = vector.extract_strided_slice %163 {offsets = [0, 64], sizes = [2, 32], strides = [1, 1]} : vector<2x128xf32> to vector<2x32xf32>
    %177 = math.tanh %176 : vector<2x32xf32>
    %178 = vector.extract_strided_slice %163 {offsets = [0, 96], sizes = [2, 32], strides = [1, 1]} : vector<2x128xf32> to vector<2x32xf32>
    %179 = arith.negf %178 : vector<2x32xf32>
    %180 = math.exp %179 : vector<2x32xf32>
    %cst_56 = arith.constant 1.000000e+00 : f32
    %181 = vector.broadcast %cst_56 : f32 to vector<2x32xf32>
    %182 = arith.addf %181, %180 : vector<2x32xf32>
    %183 = arith.divf %181, %182 : vector<2x32xf32>
    %184 = arith.mulf %175, %109 : vector<2x32xf32>
    %185 = arith.mulf %169, %177 : vector<2x32xf32>
    %186 = arith.addf %184, %185 : vector<2x32xf32>
    %187 = math.tanh %186 : vector<2x32xf32>
    %188 = arith.mulf %183, %187 : vector<2x32xf32>
    %189 = arith.index_cast %c2_i32 : i32 to index
    %c0_57 = arith.constant 0 : index
    %c0_58 = arith.constant 0 : index
    %190 = vector.load %arg5[%189, %c0_57, %c0_58] : memref<8x2x64xf32, #tpu.memory_space<vmem>>, vector<1x2x32xf32>
    %191 = vector.shape_cast %190 : vector<1x2x32xf32> to vector<2x32xf32>
    %192 = vector.shape_cast %188 : vector<2x32xf32> to vector<1x2x32xf32>
    tpu.vector_store %arg5[%189, %c0_57, %c0_58], %192 {strides = array<i32>} : memref<8x2x64xf32, #tpu.memory_space<vmem>>, vector<1x2x32xf32>,
    %c7_i32_59 = arith.constant 7 : i32
    %193 = arith.subi %c7_i32_59, %c2_i32 : i32
    %194 = arith.index_cast %193 : i32 to index
    %c0_60 = arith.constant 0 : index
    %c0_61 = arith.constant 0 : index
    %195 = vector.load %arg0[%194, %c0_60, %c0_61] : memref<8x2x16xf32, #tpu.memory_space<vmem>>, vector<1x2x16xf32>
    %196 = vector.shape_cast %195 : vector<1x2x16xf32> to vector<2x16xf32>
    %197 = tpu.concatenate %196, %150 in 1 : vector<2x16xf32>, vector<2x32xf32> -> vector<2x48xf32>
    %c0_62 = arith.constant 0 : index
    %c0_63 = arith.constant 0 : index
    %198 = vector.load %arg3[%c0_62, %c0_63] : memref<48x128xf32, #tpu.memory_space<vmem>>, vector<48x128xf32>
    %cst_64 = arith.constant dense<0.000000e+00> : vector<2x128xf32>
    %199 = tpu.matmul %197, %198, %cst_64 {dimension_numbers = #tpu.dot_dimension_numbers<[1], [0], [0], [1], [0, 0, 1, 1], [], []>} : vector<2x48xf32>, vector<48x128xf32>, vector<2x128xf32> -> vector<2x128xf32>
    %c0_65 = arith.constant 0 : index
    %c0_66 = arith.constant 0 : index
    %200 = vector.load %arg4[%c0_65, %c0_66] : memref<1x128xf32, #tpu.memory_space<vmem>>, vector<1x128xf32>
    %201 = vector.broadcast %200 : vector<1x128xf32> to vector<2x128xf32>
    %202 = arith.addf %199, %201 : vector<2x128xf32>
    %203 = vector.extract_strided_slice %202 {offsets = [0, 0], sizes = [2, 32], strides = [1, 1]} : vector<2x128xf32> to vector<2x32xf32>
    %204 = arith.negf %203 : vector<2x32xf32>
    %205 = math.exp %204 : vector<2x32xf32>
    %cst_67 = arith.constant 1.000000e+00 : f32
    %206 = vector.broadcast %cst_67 : f32 to vector<2x32xf32>
    %207 = arith.addf %206, %205 : vector<2x32xf32>
    %208 = arith.divf %206, %207 : vector<2x32xf32>
    %209 = vector.extract_strided_slice %202 {offsets = [0, 32], sizes = [2, 32], strides = [1, 1]} : vector<2x128xf32> to vector<2x32xf32>
    %210 = arith.negf %209 : vector<2x32xf32>
    %211 = math.exp %210 : vector<2x32xf32>
    %cst_68 = arith.constant 1.000000e+00 : f32
    %212 = vector.broadcast %cst_68 : f32 to vector<2x32xf32>
    %213 = arith.addf %212, %211 : vector<2x32xf32>
    %214 = arith.divf %212, %213 : vector<2x32xf32>
    %215 = vector.extract_strided_slice %202 {offsets = [0, 64], sizes = [2, 32], strides = [1, 1]} : vector<2x128xf32> to vector<2x32xf32>
    %216 = math.tanh %215 : vector<2x32xf32>
    %217 = vector.extract_strided_slice %202 {offsets = [0, 96], sizes = [2, 32], strides = [1, 1]} : vector<2x128xf32> to vector<2x32xf32>
    %218 = arith.negf %217 : vector<2x32xf32>
    %219 = math.exp %218 : vector<2x32xf32>
    %cst_69 = arith.constant 1.000000e+00 : f32
    %220 = vector.broadcast %cst_69 : f32 to vector<2x32xf32>
    %221 = arith.addf %220, %219 : vector<2x32xf32>
    %222 = arith.divf %220, %221 : vector<2x32xf32>
    %223 = arith.mulf %214, %148 : vector<2x32xf32>
    %224 = arith.mulf %208, %216 : vector<2x32xf32>
    %225 = arith.addf %223, %224 : vector<2x32xf32>
    %226 = math.tanh %225 : vector<2x32xf32>
    %227 = arith.mulf %222, %226 : vector<2x32xf32>
    %228 = arith.index_cast %193 : i32 to index
    %c0_70 = arith.constant 0 : index
    %c32_71 = arith.constant 32 : index
    %229 = vector.load %arg5[%228, %c0_70, %c32_71] : memref<8x2x64xf32, #tpu.memory_space<vmem>>, vector<1x2x32xf32>
    %230 = vector.shape_cast %229 : vector<1x2x32xf32> to vector<2x32xf32>
    %231 = vector.shape_cast %227 : vector<2x32xf32> to vector<1x2x32xf32>
    tpu.vector_store %arg5[%228, %c0_70, %c32_71], %231 {strides = array<i32>} : memref<8x2x64xf32, #tpu.memory_space<vmem>>, vector<1x2x32xf32>,
    %c3_i32 = arith.constant 3 : i32
    %232 = arith.index_cast %c3_i32 : i32 to index
    %c0_72 = arith.constant 0 : index
    %c0_73 = arith.constant 0 : index
    %233 = vector.load %arg0[%232, %c0_72, %c0_73] : memref<8x2x16xf32, #tpu.memory_space<vmem>>, vector<1x2x16xf32>
    %234 = vector.shape_cast %233 : vector<1x2x16xf32> to vector<2x16xf32>
    %235 = tpu.concatenate %234, %188 in 1 : vector<2x16xf32>, vector<2x32xf32> -> vector<2x48xf32>
    %c0_74 = arith.constant 0 : index
    %c0_75 = arith.constant 0 : index
    %236 = vector.load %arg1[%c0_74, %c0_75] : memref<48x128xf32, #tpu.memory_space<vmem>>, vector<48x128xf32>
    %cst_76 = arith.constant dense<0.000000e+00> : vector<2x128xf32>
    %237 = tpu.matmul %235, %236, %cst_76 {dimension_numbers = #tpu.dot_dimension_numbers<[1], [0], [0], [1], [0, 0, 1, 1], [], []>} : vector<2x48xf32>, vector<48x128xf32>, vector<2x128xf32> -> vector<2x128xf32>
    %c0_77 = arith.constant 0 : index
    %c0_78 = arith.constant 0 : index
    %238 = vector.load %arg2[%c0_77, %c0_78] : memref<1x128xf32, #tpu.memory_space<vmem>>, vector<1x128xf32>
    %239 = vector.broadcast %238 : vector<1x128xf32> to vector<2x128xf32>
    %240 = arith.addf %237, %239 : vector<2x128xf32>
    %241 = vector.extract_strided_slice %240 {offsets = [0, 0], sizes = [2, 32], strides = [1, 1]} : vector<2x128xf32> to vector<2x32xf32>
    %242 = arith.negf %241 : vector<2x32xf32>
    %243 = math.exp %242 : vector<2x32xf32>
    %cst_79 = arith.constant 1.000000e+00 : f32
    %244 = vector.broadcast %cst_79 : f32 to vector<2x32xf32>
    %245 = arith.addf %244, %243 : vector<2x32xf32>
    %246 = arith.divf %244, %245 : vector<2x32xf32>
    %247 = vector.extract_strided_slice %240 {offsets = [0, 32], sizes = [2, 32], strides = [1, 1]} : vector<2x128xf32> to vector<2x32xf32>
    %248 = arith.negf %247 : vector<2x32xf32>
    %249 = math.exp %248 : vector<2x32xf32>
    %cst_80 = arith.constant 1.000000e+00 : f32
    %250 = vector.broadcast %cst_80 : f32 to vector<2x32xf32>
    %251 = arith.addf %250, %249 : vector<2x32xf32>
    %252 = arith.divf %250, %251 : vector<2x32xf32>
    %253 = vector.extract_strided_slice %240 {offsets = [0, 64], sizes = [2, 32], strides = [1, 1]} : vector<2x128xf32> to vector<2x32xf32>
    %254 = math.tanh %253 : vector<2x32xf32>
    %255 = vector.extract_strided_slice %240 {offsets = [0, 96], sizes = [2, 32], strides = [1, 1]} : vector<2x128xf32> to vector<2x32xf32>
    %256 = arith.negf %255 : vector<2x32xf32>
    %257 = math.exp %256 : vector<2x32xf32>
    %cst_81 = arith.constant 1.000000e+00 : f32
    %258 = vector.broadcast %cst_81 : f32 to vector<2x32xf32>
    %259 = arith.addf %258, %257 : vector<2x32xf32>
    %260 = arith.divf %258, %259 : vector<2x32xf32>
    %261 = arith.mulf %252, %186 : vector<2x32xf32>
    %262 = arith.mulf %246, %254 : vector<2x32xf32>
    %263 = arith.addf %261, %262 : vector<2x32xf32>
    %264 = math.tanh %263 : vector<2x32xf32>
    %265 = arith.mulf %260, %264 : vector<2x32xf32>
    %266 = arith.index_cast %c3_i32 : i32 to index
    %c0_82 = arith.constant 0 : index
    %c0_83 = arith.constant 0 : index
    %267 = vector.load %arg5[%266, %c0_82, %c0_83] : memref<8x2x64xf32, #tpu.memory_space<vmem>>, vector<1x2x32xf32>
    %268 = vector.shape_cast %267 : vector<1x2x32xf32> to vector<2x32xf32>
    %269 = vector.shape_cast %265 : vector<2x32xf32> to vector<1x2x32xf32>
    tpu.vector_store %arg5[%266, %c0_82, %c0_83], %269 {strides = array<i32>} : memref<8x2x64xf32, #tpu.memory_space<vmem>>, vector<1x2x32xf32>,
    %c7_i32_84 = arith.constant 7 : i32
    %270 = arith.subi %c7_i32_84, %c3_i32 : i32
    %271 = arith.index_cast %270 : i32 to index
    %c0_85 = arith.constant 0 : index
    %c0_86 = arith.constant 0 : index
    %272 = vector.load %arg0[%271, %c0_85, %c0_86] : memref<8x2x16xf32, #tpu.memory_space<vmem>>, vector<1x2x16xf32>
    %273 = vector.shape_cast %272 : vector<1x2x16xf32> to vector<2x16xf32>
    %274 = tpu.concatenate %273, %227 in 1 : vector<2x16xf32>, vector<2x32xf32> -> vector<2x48xf32>
    %c0_87 = arith.constant 0 : index
    %c0_88 = arith.constant 0 : index
    %275 = vector.load %arg3[%c0_87, %c0_88] : memref<48x128xf32, #tpu.memory_space<vmem>>, vector<48x128xf32>
    %cst_89 = arith.constant dense<0.000000e+00> : vector<2x128xf32>
    %276 = tpu.matmul %274, %275, %cst_89 {dimension_numbers = #tpu.dot_dimension_numbers<[1], [0], [0], [1], [0, 0, 1, 1], [], []>} : vector<2x48xf32>, vector<48x128xf32>, vector<2x128xf32> -> vector<2x128xf32>
    %c0_90 = arith.constant 0 : index
    %c0_91 = arith.constant 0 : index
    %277 = vector.load %arg4[%c0_90, %c0_91] : memref<1x128xf32, #tpu.memory_space<vmem>>, vector<1x128xf32>
    %278 = vector.broadcast %277 : vector<1x128xf32> to vector<2x128xf32>
    %279 = arith.addf %276, %278 : vector<2x128xf32>
    %280 = vector.extract_strided_slice %279 {offsets = [0, 0], sizes = [2, 32], strides = [1, 1]} : vector<2x128xf32> to vector<2x32xf32>
    %281 = arith.negf %280 : vector<2x32xf32>
    %282 = math.exp %281 : vector<2x32xf32>
    %cst_92 = arith.constant 1.000000e+00 : f32
    %283 = vector.broadcast %cst_92 : f32 to vector<2x32xf32>
    %284 = arith.addf %283, %282 : vector<2x32xf32>
    %285 = arith.divf %283, %284 : vector<2x32xf32>
    %286 = vector.extract_strided_slice %279 {offsets = [0, 32], sizes = [2, 32], strides = [1, 1]} : vector<2x128xf32> to vector<2x32xf32>
    %287 = arith.negf %286 : vector<2x32xf32>
    %288 = math.exp %287 : vector<2x32xf32>
    %cst_93 = arith.constant 1.000000e+00 : f32
    %289 = vector.broadcast %cst_93 : f32 to vector<2x32xf32>
    %290 = arith.addf %289, %288 : vector<2x32xf32>
    %291 = arith.divf %289, %290 : vector<2x32xf32>
    %292 = vector.extract_strided_slice %279 {offsets = [0, 64], sizes = [2, 32], strides = [1, 1]} : vector<2x128xf32> to vector<2x32xf32>
    %293 = math.tanh %292 : vector<2x32xf32>
    %294 = vector.extract_strided_slice %279 {offsets = [0, 96], sizes = [2, 32], strides = [1, 1]} : vector<2x128xf32> to vector<2x32xf32>
    %295 = arith.negf %294 : vector<2x32xf32>
    %296 = math.exp %295 : vector<2x32xf32>
    %cst_94 = arith.constant 1.000000e+00 : f32
    %297 = vector.broadcast %cst_94 : f32 to vector<2x32xf32>
    %298 = arith.addf %297, %296 : vector<2x32xf32>
    %299 = arith.divf %297, %298 : vector<2x32xf32>
    %300 = arith.mulf %291, %225 : vector<2x32xf32>
    %301 = arith.mulf %285, %293 : vector<2x32xf32>
    %302 = arith.addf %300, %301 : vector<2x32xf32>
    %303 = math.tanh %302 : vector<2x32xf32>
    %304 = arith.mulf %299, %303 : vector<2x32xf32>
    %305 = arith.index_cast %270 : i32 to index
    %c0_95 = arith.constant 0 : index
    %c32_96 = arith.constant 32 : index
    %306 = vector.load %arg5[%305, %c0_95, %c32_96] : memref<8x2x64xf32, #tpu.memory_space<vmem>>, vector<1x2x32xf32>
    %307 = vector.shape_cast %306 : vector<1x2x32xf32> to vector<2x32xf32>
    %308 = vector.shape_cast %304 : vector<2x32xf32> to vector<1x2x32xf32>
    tpu.vector_store %arg5[%305, %c0_95, %c32_96], %308 {strides = array<i32>} : memref<8x2x64xf32, #tpu.memory_space<vmem>>, vector<1x2x32xf32>,
    %c4_i32 = arith.constant 4 : i32
    %309 = arith.index_cast %c4_i32 : i32 to index
    %c0_97 = arith.constant 0 : index
    %c0_98 = arith.constant 0 : index
    %310 = vector.load %arg0[%309, %c0_97, %c0_98] : memref<8x2x16xf32, #tpu.memory_space<vmem>>, vector<1x2x16xf32>
    %311 = vector.shape_cast %310 : vector<1x2x16xf32> to vector<2x16xf32>
    %312 = tpu.concatenate %311, %265 in 1 : vector<2x16xf32>, vector<2x32xf32> -> vector<2x48xf32>
    %c0_99 = arith.constant 0 : index
    %c0_100 = arith.constant 0 : index
    %313 = vector.load %arg1[%c0_99, %c0_100] : memref<48x128xf32, #tpu.memory_space<vmem>>, vector<48x128xf32>
    %cst_101 = arith.constant dense<0.000000e+00> : vector<2x128xf32>
    %314 = tpu.matmul %312, %313, %cst_101 {dimension_numbers = #tpu.dot_dimension_numbers<[1], [0], [0], [1], [0, 0, 1, 1], [], []>} : vector<2x48xf32>, vector<48x128xf32>, vector<2x128xf32> -> vector<2x128xf32>
    %c0_102 = arith.constant 0 : index
    %c0_103 = arith.constant 0 : index
    %315 = vector.load %arg2[%c0_102, %c0_103] : memref<1x128xf32, #tpu.memory_space<vmem>>, vector<1x128xf32>
    %316 = vector.broadcast %315 : vector<1x128xf32> to vector<2x128xf32>
    %317 = arith.addf %314, %316 : vector<2x128xf32>
    %318 = vector.extract_strided_slice %317 {offsets = [0, 0], sizes = [2, 32], strides = [1, 1]} : vector<2x128xf32> to vector<2x32xf32>
    %319 = arith.negf %318 : vector<2x32xf32>
    %320 = math.exp %319 : vector<2x32xf32>
    %cst_104 = arith.constant 1.000000e+00 : f32
    %321 = vector.broadcast %cst_104 : f32 to vector<2x32xf32>
    %322 = arith.addf %321, %320 : vector<2x32xf32>
    %323 = arith.divf %321, %322 : vector<2x32xf32>
    %324 = vector.extract_strided_slice %317 {offsets = [0, 32], sizes = [2, 32], strides = [1, 1]} : vector<2x128xf32> to vector<2x32xf32>
    %325 = arith.negf %324 : vector<2x32xf32>
    %326 = math.exp %325 : vector<2x32xf32>
    %cst_105 = arith.constant 1.000000e+00 : f32
    %327 = vector.broadcast %cst_105 : f32 to vector<2x32xf32>
    %328 = arith.addf %327, %326 : vector<2x32xf32>
    %329 = arith.divf %327, %328 : vector<2x32xf32>
    %330 = vector.extract_strided_slice %317 {offsets = [0, 64], sizes = [2, 32], strides = [1, 1]} : vector<2x128xf32> to vector<2x32xf32>
    %331 = math.tanh %330 : vector<2x32xf32>
    %332 = vector.extract_strided_slice %317 {offsets = [0, 96], sizes = [2, 32], strides = [1, 1]} : vector<2x128xf32> to vector<2x32xf32>
    %333 = arith.negf %332 : vector<2x32xf32>
    %334 = math.exp %333 : vector<2x32xf32>
    %cst_106 = arith.constant 1.000000e+00 : f32
    %335 = vector.broadcast %cst_106 : f32 to vector<2x32xf32>
    %336 = arith.addf %335, %334 : vector<2x32xf32>
    %337 = arith.divf %335, %336 : vector<2x32xf32>
    %338 = arith.mulf %329, %263 : vector<2x32xf32>
    %339 = arith.mulf %323, %331 : vector<2x32xf32>
    %340 = arith.addf %338, %339 : vector<2x32xf32>
    %341 = math.tanh %340 : vector<2x32xf32>
    %342 = arith.mulf %337, %341 : vector<2x32xf32>
    %343 = arith.index_cast %c4_i32 : i32 to index
    %c0_107 = arith.constant 0 : index
    %c0_108 = arith.constant 0 : index
    %344 = vector.load %arg5[%343, %c0_107, %c0_108] : memref<8x2x64xf32, #tpu.memory_space<vmem>>, vector<1x2x32xf32>
    %345 = vector.shape_cast %344 : vector<1x2x32xf32> to vector<2x32xf32>
    %346 = vector.shape_cast %342 : vector<2x32xf32> to vector<1x2x32xf32>
    tpu.vector_store %arg5[%343, %c0_107, %c0_108], %346 {strides = array<i32>} : memref<8x2x64xf32, #tpu.memory_space<vmem>>, vector<1x2x32xf32>,
    %c7_i32_109 = arith.constant 7 : i32
    %347 = arith.subi %c7_i32_109, %c4_i32 : i32
    %348 = arith.index_cast %347 : i32 to index
    %c0_110 = arith.constant 0 : index
    %c0_111 = arith.constant 0 : index
    %349 = vector.load %arg0[%348, %c0_110, %c0_111] : memref<8x2x16xf32, #tpu.memory_space<vmem>>, vector<1x2x16xf32>
    %350 = vector.shape_cast %349 : vector<1x2x16xf32> to vector<2x16xf32>
    %351 = tpu.concatenate %350, %304 in 1 : vector<2x16xf32>, vector<2x32xf32> -> vector<2x48xf32>
    %c0_112 = arith.constant 0 : index
    %c0_113 = arith.constant 0 : index
    %352 = vector.load %arg3[%c0_112, %c0_113] : memref<48x128xf32, #tpu.memory_space<vmem>>, vector<48x128xf32>
    %cst_114 = arith.constant dense<0.000000e+00> : vector<2x128xf32>
    %353 = tpu.matmul %351, %352, %cst_114 {dimension_numbers = #tpu.dot_dimension_numbers<[1], [0], [0], [1], [0, 0, 1, 1], [], []>} : vector<2x48xf32>, vector<48x128xf32>, vector<2x128xf32> -> vector<2x128xf32>
    %c0_115 = arith.constant 0 : index
    %c0_116 = arith.constant 0 : index
    %354 = vector.load %arg4[%c0_115, %c0_116] : memref<1x128xf32, #tpu.memory_space<vmem>>, vector<1x128xf32>
    %355 = vector.broadcast %354 : vector<1x128xf32> to vector<2x128xf32>
    %356 = arith.addf %353, %355 : vector<2x128xf32>
    %357 = vector.extract_strided_slice %356 {offsets = [0, 0], sizes = [2, 32], strides = [1, 1]} : vector<2x128xf32> to vector<2x32xf32>
    %358 = arith.negf %357 : vector<2x32xf32>
    %359 = math.exp %358 : vector<2x32xf32>
    %cst_117 = arith.constant 1.000000e+00 : f32
    %360 = vector.broadcast %cst_117 : f32 to vector<2x32xf32>
    %361 = arith.addf %360, %359 : vector<2x32xf32>
    %362 = arith.divf %360, %361 : vector<2x32xf32>
    %363 = vector.extract_strided_slice %356 {offsets = [0, 32], sizes = [2, 32], strides = [1, 1]} : vector<2x128xf32> to vector<2x32xf32>
    %364 = arith.negf %363 : vector<2x32xf32>
    %365 = math.exp %364 : vector<2x32xf32>
    %cst_118 = arith.constant 1.000000e+00 : f32
    %366 = vector.broadcast %cst_118 : f32 to vector<2x32xf32>
    %367 = arith.addf %366, %365 : vector<2x32xf32>
    %368 = arith.divf %366, %367 : vector<2x32xf32>
    %369 = vector.extract_strided_slice %356 {offsets = [0, 64], sizes = [2, 32], strides = [1, 1]} : vector<2x128xf32> to vector<2x32xf32>
    %370 = math.tanh %369 : vector<2x32xf32>
    %371 = vector.extract_strided_slice %356 {offsets = [0, 96], sizes = [2, 32], strides = [1, 1]} : vector<2x128xf32> to vector<2x32xf32>
    %372 = arith.negf %371 : vector<2x32xf32>
    %373 = math.exp %372 : vector<2x32xf32>
    %cst_119 = arith.constant 1.000000e+00 : f32
    %374 = vector.broadcast %cst_119 : f32 to vector<2x32xf32>
    %375 = arith.addf %374, %373 : vector<2x32xf32>
    %376 = arith.divf %374, %375 : vector<2x32xf32>
    %377 = arith.mulf %368, %302 : vector<2x32xf32>
    %378 = arith.mulf %362, %370 : vector<2x32xf32>
    %379 = arith.addf %377, %378 : vector<2x32xf32>
    %380 = math.tanh %379 : vector<2x32xf32>
    %381 = arith.mulf %376, %380 : vector<2x32xf32>
    %382 = arith.index_cast %347 : i32 to index
    %c0_120 = arith.constant 0 : index
    %c32_121 = arith.constant 32 : index
    %383 = vector.load %arg5[%382, %c0_120, %c32_121] : memref<8x2x64xf32, #tpu.memory_space<vmem>>, vector<1x2x32xf32>
    %384 = vector.shape_cast %383 : vector<1x2x32xf32> to vector<2x32xf32>
    %385 = vector.shape_cast %381 : vector<2x32xf32> to vector<1x2x32xf32>
    tpu.vector_store %arg5[%382, %c0_120, %c32_121], %385 {strides = array<i32>} : memref<8x2x64xf32, #tpu.memory_space<vmem>>, vector<1x2x32xf32>,
    %c5_i32 = arith.constant 5 : i32
    %386 = arith.index_cast %c5_i32 : i32 to index
    %c0_122 = arith.constant 0 : index
    %c0_123 = arith.constant 0 : index
    %387 = vector.load %arg0[%386, %c0_122, %c0_123] : memref<8x2x16xf32, #tpu.memory_space<vmem>>, vector<1x2x16xf32>
    %388 = vector.shape_cast %387 : vector<1x2x16xf32> to vector<2x16xf32>
    %389 = tpu.concatenate %388, %342 in 1 : vector<2x16xf32>, vector<2x32xf32> -> vector<2x48xf32>
    %c0_124 = arith.constant 0 : index
    %c0_125 = arith.constant 0 : index
    %390 = vector.load %arg1[%c0_124, %c0_125] : memref<48x128xf32, #tpu.memory_space<vmem>>, vector<48x128xf32>
    %cst_126 = arith.constant dense<0.000000e+00> : vector<2x128xf32>
    %391 = tpu.matmul %389, %390, %cst_126 {dimension_numbers = #tpu.dot_dimension_numbers<[1], [0], [0], [1], [0, 0, 1, 1], [], []>} : vector<2x48xf32>, vector<48x128xf32>, vector<2x128xf32> -> vector<2x128xf32>
    %c0_127 = arith.constant 0 : index
    %c0_128 = arith.constant 0 : index
    %392 = vector.load %arg2[%c0_127, %c0_128] : memref<1x128xf32, #tpu.memory_space<vmem>>, vector<1x128xf32>
    %393 = vector.broadcast %392 : vector<1x128xf32> to vector<2x128xf32>
    %394 = arith.addf %391, %393 : vector<2x128xf32>
    %395 = vector.extract_strided_slice %394 {offsets = [0, 0], sizes = [2, 32], strides = [1, 1]} : vector<2x128xf32> to vector<2x32xf32>
    %396 = arith.negf %395 : vector<2x32xf32>
    %397 = math.exp %396 : vector<2x32xf32>
    %cst_129 = arith.constant 1.000000e+00 : f32
    %398 = vector.broadcast %cst_129 : f32 to vector<2x32xf32>
    %399 = arith.addf %398, %397 : vector<2x32xf32>
    %400 = arith.divf %398, %399 : vector<2x32xf32>
    %401 = vector.extract_strided_slice %394 {offsets = [0, 32], sizes = [2, 32], strides = [1, 1]} : vector<2x128xf32> to vector<2x32xf32>
    %402 = arith.negf %401 : vector<2x32xf32>
    %403 = math.exp %402 : vector<2x32xf32>
    %cst_130 = arith.constant 1.000000e+00 : f32
    %404 = vector.broadcast %cst_130 : f32 to vector<2x32xf32>
    %405 = arith.addf %404, %403 : vector<2x32xf32>
    %406 = arith.divf %404, %405 : vector<2x32xf32>
    %407 = vector.extract_strided_slice %394 {offsets = [0, 64], sizes = [2, 32], strides = [1, 1]} : vector<2x128xf32> to vector<2x32xf32>
    %408 = math.tanh %407 : vector<2x32xf32>
    %409 = vector.extract_strided_slice %394 {offsets = [0, 96], sizes = [2, 32], strides = [1, 1]} : vector<2x128xf32> to vector<2x32xf32>
    %410 = arith.negf %409 : vector<2x32xf32>
    %411 = math.exp %410 : vector<2x32xf32>
    %cst_131 = arith.constant 1.000000e+00 : f32
    %412 = vector.broadcast %cst_131 : f32 to vector<2x32xf32>
    %413 = arith.addf %412, %411 : vector<2x32xf32>
    %414 = arith.divf %412, %413 : vector<2x32xf32>
    %415 = arith.mulf %406, %340 : vector<2x32xf32>
    %416 = arith.mulf %400, %408 : vector<2x32xf32>
    %417 = arith.addf %415, %416 : vector<2x32xf32>
    %418 = math.tanh %417 : vector<2x32xf32>
    %419 = arith.mulf %414, %418 : vector<2x32xf32>
    %420 = arith.index_cast %c5_i32 : i32 to index
    %c0_132 = arith.constant 0 : index
    %c0_133 = arith.constant 0 : index
    %421 = vector.load %arg5[%420, %c0_132, %c0_133] : memref<8x2x64xf32, #tpu.memory_space<vmem>>, vector<1x2x32xf32>
    %422 = vector.shape_cast %421 : vector<1x2x32xf32> to vector<2x32xf32>
    %423 = vector.shape_cast %419 : vector<2x32xf32> to vector<1x2x32xf32>
    tpu.vector_store %arg5[%420, %c0_132, %c0_133], %423 {strides = array<i32>} : memref<8x2x64xf32, #tpu.memory_space<vmem>>, vector<1x2x32xf32>,
    %c7_i32_134 = arith.constant 7 : i32
    %424 = arith.subi %c7_i32_134, %c5_i32 : i32
    %425 = arith.index_cast %424 : i32 to index
    %c0_135 = arith.constant 0 : index
    %c0_136 = arith.constant 0 : index
    %426 = vector.load %arg0[%425, %c0_135, %c0_136] : memref<8x2x16xf32, #tpu.memory_space<vmem>>, vector<1x2x16xf32>
    %427 = vector.shape_cast %426 : vector<1x2x16xf32> to vector<2x16xf32>
    %428 = tpu.concatenate %427, %381 in 1 : vector<2x16xf32>, vector<2x32xf32> -> vector<2x48xf32>
    %c0_137 = arith.constant 0 : index
    %c0_138 = arith.constant 0 : index
    %429 = vector.load %arg3[%c0_137, %c0_138] : memref<48x128xf32, #tpu.memory_space<vmem>>, vector<48x128xf32>
    %cst_139 = arith.constant dense<0.000000e+00> : vector<2x128xf32>
    %430 = tpu.matmul %428, %429, %cst_139 {dimension_numbers = #tpu.dot_dimension_numbers<[1], [0], [0], [1], [0, 0, 1, 1], [], []>} : vector<2x48xf32>, vector<48x128xf32>, vector<2x128xf32> -> vector<2x128xf32>
    %c0_140 = arith.constant 0 : index
    %c0_141 = arith.constant 0 : index
    %431 = vector.load %arg4[%c0_140, %c0_141] : memref<1x128xf32, #tpu.memory_space<vmem>>, vector<1x128xf32>
    %432 = vector.broadcast %431 : vector<1x128xf32> to vector<2x128xf32>
    %433 = arith.addf %430, %432 : vector<2x128xf32>
    %434 = vector.extract_strided_slice %433 {offsets = [0, 0], sizes = [2, 32], strides = [1, 1]} : vector<2x128xf32> to vector<2x32xf32>
    %435 = arith.negf %434 : vector<2x32xf32>
    %436 = math.exp %435 : vector<2x32xf32>
    %cst_142 = arith.constant 1.000000e+00 : f32
    %437 = vector.broadcast %cst_142 : f32 to vector<2x32xf32>
    %438 = arith.addf %437, %436 : vector<2x32xf32>
    %439 = arith.divf %437, %438 : vector<2x32xf32>
    %440 = vector.extract_strided_slice %433 {offsets = [0, 32], sizes = [2, 32], strides = [1, 1]} : vector<2x128xf32> to vector<2x32xf32>
    %441 = arith.negf %440 : vector<2x32xf32>
    %442 = math.exp %441 : vector<2x32xf32>
    %cst_143 = arith.constant 1.000000e+00 : f32
    %443 = vector.broadcast %cst_143 : f32 to vector<2x32xf32>
    %444 = arith.addf %443, %442 : vector<2x32xf32>
    %445 = arith.divf %443, %444 : vector<2x32xf32>
    %446 = vector.extract_strided_slice %433 {offsets = [0, 64], sizes = [2, 32], strides = [1, 1]} : vector<2x128xf32> to vector<2x32xf32>
    %447 = math.tanh %446 : vector<2x32xf32>
    %448 = vector.extract_strided_slice %433 {offsets = [0, 96], sizes = [2, 32], strides = [1, 1]} : vector<2x128xf32> to vector<2x32xf32>
    %449 = arith.negf %448 : vector<2x32xf32>
    %450 = math.exp %449 : vector<2x32xf32>
    %cst_144 = arith.constant 1.000000e+00 : f32
    %451 = vector.broadcast %cst_144 : f32 to vector<2x32xf32>
    %452 = arith.addf %451, %450 : vector<2x32xf32>
    %453 = arith.divf %451, %452 : vector<2x32xf32>
    %454 = arith.mulf %445, %379 : vector<2x32xf32>
    %455 = arith.mulf %439, %447 : vector<2x32xf32>
    %456 = arith.addf %454, %455 : vector<2x32xf32>
    %457 = math.tanh %456 : vector<2x32xf32>
    %458 = arith.mulf %453, %457 : vector<2x32xf32>
    %459 = arith.index_cast %424 : i32 to index
    %c0_145 = arith.constant 0 : index
    %c32_146 = arith.constant 32 : index
    %460 = vector.load %arg5[%459, %c0_145, %c32_146] : memref<8x2x64xf32, #tpu.memory_space<vmem>>, vector<1x2x32xf32>
    %461 = vector.shape_cast %460 : vector<1x2x32xf32> to vector<2x32xf32>
    %462 = vector.shape_cast %458 : vector<2x32xf32> to vector<1x2x32xf32>
    tpu.vector_store %arg5[%459, %c0_145, %c32_146], %462 {strides = array<i32>} : memref<8x2x64xf32, #tpu.memory_space<vmem>>, vector<1x2x32xf32>,
    %c6_i32 = arith.constant 6 : i32
    %463 = arith.index_cast %c6_i32 : i32 to index
    %c0_147 = arith.constant 0 : index
    %c0_148 = arith.constant 0 : index
    %464 = vector.load %arg0[%463, %c0_147, %c0_148] : memref<8x2x16xf32, #tpu.memory_space<vmem>>, vector<1x2x16xf32>
    %465 = vector.shape_cast %464 : vector<1x2x16xf32> to vector<2x16xf32>
    %466 = tpu.concatenate %465, %419 in 1 : vector<2x16xf32>, vector<2x32xf32> -> vector<2x48xf32>
    %c0_149 = arith.constant 0 : index
    %c0_150 = arith.constant 0 : index
    %467 = vector.load %arg1[%c0_149, %c0_150] : memref<48x128xf32, #tpu.memory_space<vmem>>, vector<48x128xf32>
    %cst_151 = arith.constant dense<0.000000e+00> : vector<2x128xf32>
    %468 = tpu.matmul %466, %467, %cst_151 {dimension_numbers = #tpu.dot_dimension_numbers<[1], [0], [0], [1], [0, 0, 1, 1], [], []>} : vector<2x48xf32>, vector<48x128xf32>, vector<2x128xf32> -> vector<2x128xf32>
    %c0_152 = arith.constant 0 : index
    %c0_153 = arith.constant 0 : index
    %469 = vector.load %arg2[%c0_152, %c0_153] : memref<1x128xf32, #tpu.memory_space<vmem>>, vector<1x128xf32>
    %470 = vector.broadcast %469 : vector<1x128xf32> to vector<2x128xf32>
    %471 = arith.addf %468, %470 : vector<2x128xf32>
    %472 = vector.extract_strided_slice %471 {offsets = [0, 0], sizes = [2, 32], strides = [1, 1]} : vector<2x128xf32> to vector<2x32xf32>
    %473 = arith.negf %472 : vector<2x32xf32>
    %474 = math.exp %473 : vector<2x32xf32>
    %cst_154 = arith.constant 1.000000e+00 : f32
    %475 = vector.broadcast %cst_154 : f32 to vector<2x32xf32>
    %476 = arith.addf %475, %474 : vector<2x32xf32>
    %477 = arith.divf %475, %476 : vector<2x32xf32>
    %478 = vector.extract_strided_slice %471 {offsets = [0, 32], sizes = [2, 32], strides = [1, 1]} : vector<2x128xf32> to vector<2x32xf32>
    %479 = arith.negf %478 : vector<2x32xf32>
    %480 = math.exp %479 : vector<2x32xf32>
    %cst_155 = arith.constant 1.000000e+00 : f32
    %481 = vector.broadcast %cst_155 : f32 to vector<2x32xf32>
    %482 = arith.addf %481, %480 : vector<2x32xf32>
    %483 = arith.divf %481, %482 : vector<2x32xf32>
    %484 = vector.extract_strided_slice %471 {offsets = [0, 64], sizes = [2, 32], strides = [1, 1]} : vector<2x128xf32> to vector<2x32xf32>
    %485 = math.tanh %484 : vector<2x32xf32>
    %486 = vector.extract_strided_slice %471 {offsets = [0, 96], sizes = [2, 32], strides = [1, 1]} : vector<2x128xf32> to vector<2x32xf32>
    %487 = arith.negf %486 : vector<2x32xf32>
    %488 = math.exp %487 : vector<2x32xf32>
    %cst_156 = arith.constant 1.000000e+00 : f32
    %489 = vector.broadcast %cst_156 : f32 to vector<2x32xf32>
    %490 = arith.addf %489, %488 : vector<2x32xf32>
    %491 = arith.divf %489, %490 : vector<2x32xf32>
    %492 = arith.mulf %483, %417 : vector<2x32xf32>
    %493 = arith.mulf %477, %485 : vector<2x32xf32>
    %494 = arith.addf %492, %493 : vector<2x32xf32>
    %495 = math.tanh %494 : vector<2x32xf32>
    %496 = arith.mulf %491, %495 : vector<2x32xf32>
    %497 = arith.index_cast %c6_i32 : i32 to index
    %c0_157 = arith.constant 0 : index
    %c0_158 = arith.constant 0 : index
    %498 = vector.load %arg5[%497, %c0_157, %c0_158] : memref<8x2x64xf32, #tpu.memory_space<vmem>>, vector<1x2x32xf32>
    %499 = vector.shape_cast %498 : vector<1x2x32xf32> to vector<2x32xf32>
    %500 = vector.shape_cast %496 : vector<2x32xf32> to vector<1x2x32xf32>
    tpu.vector_store %arg5[%497, %c0_157, %c0_158], %500 {strides = array<i32>} : memref<8x2x64xf32, #tpu.memory_space<vmem>>, vector<1x2x32xf32>,
    %c7_i32_159 = arith.constant 7 : i32
    %501 = arith.subi %c7_i32_159, %c6_i32 : i32
    %502 = arith.index_cast %501 : i32 to index
    %c0_160 = arith.constant 0 : index
    %c0_161 = arith.constant 0 : index
    %503 = vector.load %arg0[%502, %c0_160, %c0_161] : memref<8x2x16xf32, #tpu.memory_space<vmem>>, vector<1x2x16xf32>
    %504 = vector.shape_cast %503 : vector<1x2x16xf32> to vector<2x16xf32>
    %505 = tpu.concatenate %504, %458 in 1 : vector<2x16xf32>, vector<2x32xf32> -> vector<2x48xf32>
    %c0_162 = arith.constant 0 : index
    %c0_163 = arith.constant 0 : index
    %506 = vector.load %arg3[%c0_162, %c0_163] : memref<48x128xf32, #tpu.memory_space<vmem>>, vector<48x128xf32>
    %cst_164 = arith.constant dense<0.000000e+00> : vector<2x128xf32>
    %507 = tpu.matmul %505, %506, %cst_164 {dimension_numbers = #tpu.dot_dimension_numbers<[1], [0], [0], [1], [0, 0, 1, 1], [], []>} : vector<2x48xf32>, vector<48x128xf32>, vector<2x128xf32> -> vector<2x128xf32>
    %c0_165 = arith.constant 0 : index
    %c0_166 = arith.constant 0 : index
    %508 = vector.load %arg4[%c0_165, %c0_166] : memref<1x128xf32, #tpu.memory_space<vmem>>, vector<1x128xf32>
    %509 = vector.broadcast %508 : vector<1x128xf32> to vector<2x128xf32>
    %510 = arith.addf %507, %509 : vector<2x128xf32>
    %511 = vector.extract_strided_slice %510 {offsets = [0, 0], sizes = [2, 32], strides = [1, 1]} : vector<2x128xf32> to vector<2x32xf32>
    %512 = arith.negf %511 : vector<2x32xf32>
    %513 = math.exp %512 : vector<2x32xf32>
    %cst_167 = arith.constant 1.000000e+00 : f32
    %514 = vector.broadcast %cst_167 : f32 to vector<2x32xf32>
    %515 = arith.addf %514, %513 : vector<2x32xf32>
    %516 = arith.divf %514, %515 : vector<2x32xf32>
    %517 = vector.extract_strided_slice %510 {offsets = [0, 32], sizes = [2, 32], strides = [1, 1]} : vector<2x128xf32> to vector<2x32xf32>
    %518 = arith.negf %517 : vector<2x32xf32>
    %519 = math.exp %518 : vector<2x32xf32>
    %cst_168 = arith.constant 1.000000e+00 : f32
    %520 = vector.broadcast %cst_168 : f32 to vector<2x32xf32>
    %521 = arith.addf %520, %519 : vector<2x32xf32>
    %522 = arith.divf %520, %521 : vector<2x32xf32>
    %523 = vector.extract_strided_slice %510 {offsets = [0, 64], sizes = [2, 32], strides = [1, 1]} : vector<2x128xf32> to vector<2x32xf32>
    %524 = math.tanh %523 : vector<2x32xf32>
    %525 = vector.extract_strided_slice %510 {offsets = [0, 96], sizes = [2, 32], strides = [1, 1]} : vector<2x128xf32> to vector<2x32xf32>
    %526 = arith.negf %525 : vector<2x32xf32>
    %527 = math.exp %526 : vector<2x32xf32>
    %cst_169 = arith.constant 1.000000e+00 : f32
    %528 = vector.broadcast %cst_169 : f32 to vector<2x32xf32>
    %529 = arith.addf %528, %527 : vector<2x32xf32>
    %530 = arith.divf %528, %529 : vector<2x32xf32>
    %531 = arith.mulf %522, %456 : vector<2x32xf32>
    %532 = arith.mulf %516, %524 : vector<2x32xf32>
    %533 = arith.addf %531, %532 : vector<2x32xf32>
    %534 = math.tanh %533 : vector<2x32xf32>
    %535 = arith.mulf %530, %534 : vector<2x32xf32>
    %536 = arith.index_cast %501 : i32 to index
    %c0_170 = arith.constant 0 : index
    %c32_171 = arith.constant 32 : index
    %537 = vector.load %arg5[%536, %c0_170, %c32_171] : memref<8x2x64xf32, #tpu.memory_space<vmem>>, vector<1x2x32xf32>
    %538 = vector.shape_cast %537 : vector<1x2x32xf32> to vector<2x32xf32>
    %539 = vector.shape_cast %535 : vector<2x32xf32> to vector<1x2x32xf32>
    tpu.vector_store %arg5[%536, %c0_170, %c32_171], %539 {strides = array<i32>} : memref<8x2x64xf32, #tpu.memory_space<vmem>>, vector<1x2x32xf32>,
    %c7_i32_172 = arith.constant 7 : i32
    %540 = arith.index_cast %c7_i32_172 : i32 to index
    %c0_173 = arith.constant 0 : index
    %c0_174 = arith.constant 0 : index
    %541 = vector.load %arg0[%540, %c0_173, %c0_174] : memref<8x2x16xf32, #tpu.memory_space<vmem>>, vector<1x2x16xf32>
    %542 = vector.shape_cast %541 : vector<1x2x16xf32> to vector<2x16xf32>
    %543 = tpu.concatenate %542, %496 in 1 : vector<2x16xf32>, vector<2x32xf32> -> vector<2x48xf32>
    %c0_175 = arith.constant 0 : index
    %c0_176 = arith.constant 0 : index
    %544 = vector.load %arg1[%c0_175, %c0_176] : memref<48x128xf32, #tpu.memory_space<vmem>>, vector<48x128xf32>
    %cst_177 = arith.constant dense<0.000000e+00> : vector<2x128xf32>
    %545 = tpu.matmul %543, %544, %cst_177 {dimension_numbers = #tpu.dot_dimension_numbers<[1], [0], [0], [1], [0, 0, 1, 1], [], []>} : vector<2x48xf32>, vector<48x128xf32>, vector<2x128xf32> -> vector<2x128xf32>
    %c0_178 = arith.constant 0 : index
    %c0_179 = arith.constant 0 : index
    %546 = vector.load %arg2[%c0_178, %c0_179] : memref<1x128xf32, #tpu.memory_space<vmem>>, vector<1x128xf32>
    %547 = vector.broadcast %546 : vector<1x128xf32> to vector<2x128xf32>
    %548 = arith.addf %545, %547 : vector<2x128xf32>
    %549 = vector.extract_strided_slice %548 {offsets = [0, 0], sizes = [2, 32], strides = [1, 1]} : vector<2x128xf32> to vector<2x32xf32>
    %550 = arith.negf %549 : vector<2x32xf32>
    %551 = math.exp %550 : vector<2x32xf32>
    %cst_180 = arith.constant 1.000000e+00 : f32
    %552 = vector.broadcast %cst_180 : f32 to vector<2x32xf32>
    %553 = arith.addf %552, %551 : vector<2x32xf32>
    %554 = arith.divf %552, %553 : vector<2x32xf32>
    %555 = vector.extract_strided_slice %548 {offsets = [0, 32], sizes = [2, 32], strides = [1, 1]} : vector<2x128xf32> to vector<2x32xf32>
    %556 = arith.negf %555 : vector<2x32xf32>
    %557 = math.exp %556 : vector<2x32xf32>
    %cst_181 = arith.constant 1.000000e+00 : f32
    %558 = vector.broadcast %cst_181 : f32 to vector<2x32xf32>
    %559 = arith.addf %558, %557 : vector<2x32xf32>
    %560 = arith.divf %558, %559 : vector<2x32xf32>
    %561 = vector.extract_strided_slice %548 {offsets = [0, 64], sizes = [2, 32], strides = [1, 1]} : vector<2x128xf32> to vector<2x32xf32>
    %562 = math.tanh %561 : vector<2x32xf32>
    %563 = vector.extract_strided_slice %548 {offsets = [0, 96], sizes = [2, 32], strides = [1, 1]} : vector<2x128xf32> to vector<2x32xf32>
    %564 = arith.negf %563 : vector<2x32xf32>
    %565 = math.exp %564 : vector<2x32xf32>
    %cst_182 = arith.constant 1.000000e+00 : f32
    %566 = vector.broadcast %cst_182 : f32 to vector<2x32xf32>
    %567 = arith.addf %566, %565 : vector<2x32xf32>
    %568 = arith.divf %566, %567 : vector<2x32xf32>
    %569 = arith.mulf %560, %494 : vector<2x32xf32>
    %570 = arith.mulf %554, %562 : vector<2x32xf32>
    %571 = arith.addf %569, %570 : vector<2x32xf32>
    %572 = math.tanh %571 : vector<2x32xf32>
    %573 = arith.mulf %568, %572 : vector<2x32xf32>
    %574 = arith.index_cast %c7_i32_172 : i32 to index
    %c0_183 = arith.constant 0 : index
    %c0_184 = arith.constant 0 : index
    %575 = vector.load %arg5[%574, %c0_183, %c0_184] : memref<8x2x64xf32, #tpu.memory_space<vmem>>, vector<1x2x32xf32>
    %576 = vector.shape_cast %575 : vector<1x2x32xf32> to vector<2x32xf32>
    %577 = vector.shape_cast %573 : vector<2x32xf32> to vector<1x2x32xf32>
    tpu.vector_store %arg5[%574, %c0_183, %c0_184], %577 {strides = array<i32>} : memref<8x2x64xf32, #tpu.memory_space<vmem>>, vector<1x2x32xf32>,
    %c7_i32_185 = arith.constant 7 : i32
    %578 = arith.subi %c7_i32_185, %c7_i32_172 : i32
    %579 = arith.index_cast %578 : i32 to index
    %c0_186 = arith.constant 0 : index
    %c0_187 = arith.constant 0 : index
    %580 = vector.load %arg0[%579, %c0_186, %c0_187] : memref<8x2x16xf32, #tpu.memory_space<vmem>>, vector<1x2x16xf32>
    %581 = vector.shape_cast %580 : vector<1x2x16xf32> to vector<2x16xf32>
    %582 = tpu.concatenate %581, %535 in 1 : vector<2x16xf32>, vector<2x32xf32> -> vector<2x48xf32>
    %c0_188 = arith.constant 0 : index
    %c0_189 = arith.constant 0 : index
    %583 = vector.load %arg3[%c0_188, %c0_189] : memref<48x128xf32, #tpu.memory_space<vmem>>, vector<48x128xf32>
    %cst_190 = arith.constant dense<0.000000e+00> : vector<2x128xf32>
    %584 = tpu.matmul %582, %583, %cst_190 {dimension_numbers = #tpu.dot_dimension_numbers<[1], [0], [0], [1], [0, 0, 1, 1], [], []>} : vector<2x48xf32>, vector<48x128xf32>, vector<2x128xf32> -> vector<2x128xf32>
    %c0_191 = arith.constant 0 : index
    %c0_192 = arith.constant 0 : index
    %585 = vector.load %arg4[%c0_191, %c0_192] : memref<1x128xf32, #tpu.memory_space<vmem>>, vector<1x128xf32>
    %586 = vector.broadcast %585 : vector<1x128xf32> to vector<2x128xf32>
    %587 = arith.addf %584, %586 : vector<2x128xf32>
    %588 = vector.extract_strided_slice %587 {offsets = [0, 0], sizes = [2, 32], strides = [1, 1]} : vector<2x128xf32> to vector<2x32xf32>
    %589 = arith.negf %588 : vector<2x32xf32>
    %590 = math.exp %589 : vector<2x32xf32>
    %cst_193 = arith.constant 1.000000e+00 : f32
    %591 = vector.broadcast %cst_193 : f32 to vector<2x32xf32>
    %592 = arith.addf %591, %590 : vector<2x32xf32>
    %593 = arith.divf %591, %592 : vector<2x32xf32>
    %594 = vector.extract_strided_slice %587 {offsets = [0, 32], sizes = [2, 32], strides = [1, 1]} : vector<2x128xf32> to vector<2x32xf32>
    %595 = arith.negf %594 : vector<2x32xf32>
    %596 = math.exp %595 : vector<2x32xf32>
    %cst_194 = arith.constant 1.000000e+00 : f32
    %597 = vector.broadcast %cst_194 : f32 to vector<2x32xf32>
    %598 = arith.addf %597, %596 : vector<2x32xf32>
    %599 = arith.divf %597, %598 : vector<2x32xf32>
    %600 = vector.extract_strided_slice %587 {offsets = [0, 64], sizes = [2, 32], strides = [1, 1]} : vector<2x128xf32> to vector<2x32xf32>
    %601 = math.tanh %600 : vector<2x32xf32>
    %602 = vector.extract_strided_slice %587 {offsets = [0, 96], sizes = [2, 32], strides = [1, 1]} : vector<2x128xf32> to vector<2x32xf32>
    %603 = arith.negf %602 : vector<2x32xf32>
    %604 = math.exp %603 : vector<2x32xf32>
    %cst_195 = arith.constant 1.000000e+00 : f32
    %605 = vector.broadcast %cst_195 : f32 to vector<2x32xf32>
    %606 = arith.addf %605, %604 : vector<2x32xf32>
    %607 = arith.divf %605, %606 : vector<2x32xf32>
    %608 = arith.mulf %599, %533 : vector<2x32xf32>
    %609 = arith.mulf %593, %601 : vector<2x32xf32>
    %610 = arith.addf %608, %609 : vector<2x32xf32>
    %611 = math.tanh %610 : vector<2x32xf32>
    %612 = arith.mulf %607, %611 : vector<2x32xf32>
    %613 = arith.index_cast %578 : i32 to index
    %c0_196 = arith.constant 0 : index
    %c32_197 = arith.constant 32 : index
    %614 = vector.load %arg5[%613, %c0_196, %c32_197] : memref<8x2x64xf32, #tpu.memory_space<vmem>>, vector<1x2x32xf32>
    %615 = vector.shape_cast %614 : vector<1x2x32xf32> to vector<2x32xf32>
    %616 = vector.shape_cast %612 : vector<2x32xf32> to vector<1x2x32xf32>
    tpu.vector_store %arg5[%613, %c0_196, %c32_197], %616 {strides = array<i32>} : memref<8x2x64xf32, #tpu.memory_space<vmem>>, vector<1x2x32xf32>,
    %c8_i32 = arith.constant 8 : i32
    return
  }
}

</mosaic_0001>

<llo_original>
// kernel: tpu_custom_call.1
$region0: #{tpu_custom_call.1}
  #allocation0 [shape = 'u32[]', space=smem, size = 0x4, offset = 0x4, fixed_abs, tag = 'smem constant byte address 0x4 - core index']
  #allocation1 [shape = 'u32[144,128]{1,0:T(1,128)}', space=vmem, size = 0x12000, scoped, tag = 'internal scratch']
  %s0 = inlined_call_operand.hbm [shape: f32[8,2,16], index: 0, kind: input, shape index: {}]
  %s1 = inlined_call_operand.hbm [shape: f32[48,128], index: 1, kind: input, shape index: {}]
  %s2 = inlined_call_operand.vmem [shape: f32[1,128], index: 2, kind: input, shape index: {}]
  %s3 = inlined_call_operand.hbm [shape: f32[48,128], index: 3, kind: input, shape index: {}]
  %s4 = inlined_call_operand.vmem [shape: f32[1,128], index: 4, kind: input, shape index: {}]
  %s5 = inlined_call_operand.hbm [shape: f32[8,2,64], index: 5, kind: output, shape index: {}]
  %s6 = sld [smem:[#allocation0]]
  $region42: #{tpu_custom_call.1} parent=0
    _
  %s8 = ssub.s32 1, %s6
  %s9 = scalar_select 0, %s8, %s6
  $region1: #{tpu_custom_call.1} parent=0
    #allocation2 [shape = 'u8[8192]{0}', space=vmem, size = 0x2000, scoped, tag = 'input window, operand 0, single buffered']
    #allocation3 [shape = 's32[1]{0}', space=sflag, size = 0x4, scoped, tag = 'scoped memory for tpu_custom_call.1']
    #allocation4 [shape = 's32[1]{0}', space=sflag, size = 0x4, scoped, tag = 'scoped memory for tpu_custom_call.1']
    #allocation5 [shape = 'u8[24576]{0}', space=vmem, size = 0x6000, scoped, tag = 'input window, operand 1, single buffered']
    #allocation6 [shape = 's32[1]{0}', space=sflag, size = 0x4, scoped, tag = 'scoped memory for tpu_custom_call.1']
    #allocation7 [shape = 'u8[24576]{0}', space=vmem, size = 0x6000, scoped, tag = 'input window, operand 3, single buffered']
    #allocation8 [shape = 'u8[8192]{0}', space=vmem, size = 0x2000, scoped, tag = 'output window, operand 0, single buffered']
    %10 = vsyncpa [#allocation3], 0
    %11 = vsyncpa [#allocation6], 0
    %12 = vsyncpa [#allocation4], 0
    // Predicated region
    $region2: #{tpu_custom_call.1} parent=1 // pred_check
      _
    $region3: #{tpu_custom_call.1} parent=1 // pred_check_branch
      %14 = sbr.rel (0) target = $region5
    $region4: #{tpu_custom_call.1} parent=1 // pred_region
      %s16 = ssub.s32 256, 256
      %17 = vsyncadd [#allocation3], %s16
      %s18 = sshll.u32 [#allocation2], 4
      %s19 = int_to_ptr.vmem [resolvable:$true] %s18
      %24 = dma.hbm_to_vmem [thread:$0]  %s0, 256, %s19, [#allocation3], 32, 32, 2
    $region5: #{tpu_custom_call.1} parent=1 // pred_fallthru
      _
    // Predicated region
    $region6: #{tpu_custom_call.1} parent=1 // pred_check
      _
    $region7: #{tpu_custom_call.1} parent=1 // pred_check_branch
      %26 = sbr.rel (0) target = $region9
    $region8: #{tpu_custom_call.1} parent=1 // pred_region
      %s28 = ssub.s32 768, 768
      %29 = vsyncadd [#allocation6], %s28
      %s30 = sshll.u32 [#allocation5], 4
      %s31 = int_to_ptr.vmem [resolvable:$true] %s30
      %36 = dma.hbm_to_vmem [thread:$0]  %s1, 768, %s31, [#allocation6], 128, 128, 8
    $region9: #{tpu_custom_call.1} parent=1 // pred_fallthru
      _
    // Predicated region
    $region10: #{tpu_custom_call.1} parent=1 // pred_check
      _
    $region11: #{tpu_custom_call.1} parent=1 // pred_check_branch
      %38 = sbr.rel (0) target = $region13
    $region12: #{tpu_custom_call.1} parent=1 // pred_region
      _
    $region13: #{tpu_custom_call.1} parent=1 // pred_fallthru
      _
    // Predicated region
    $region14: #{tpu_custom_call.1} parent=1 // pred_check
      _
    $region15: #{tpu_custom_call.1} parent=1 // pred_check_branch
      %40 = sbr.rel (0) target = $region17
    $region16: #{tpu_custom_call.1} parent=1 // pred_region
      %s42 = ssub.s32 768, 768
      %43 = vsyncadd [#allocation6], %s42
      %s44 = sshll.u32 [#allocation7], 4
      %s45 = int_to_ptr.vmem [resolvable:$true] %s44
      %50 = dma.hbm_to_vmem [thread:$0]  %s3, 768, %s45, [#allocation6], 128, 128, 8
    $region17: #{tpu_custom_call.1} parent=1 // pred_fallthru
      _
    // Predicated region
    $region18: #{tpu_custom_call.1} parent=1 // pred_check
      _
    $region19: #{tpu_custom_call.1} parent=1 // pred_check_branch
      %52 = sbr.rel (0) target = $region21
    $region20: #{tpu_custom_call.1} parent=1 // pred_region
      _
    $region21: #{tpu_custom_call.1} parent=1 // pred_fallthru
      _
    // Predicated region
    $region22: #{tpu_custom_call.1} parent=1 // pred_check
      _
    $region23: #{tpu_custom_call.1} parent=1 // pred_check_branch
      %54 = sbr.rel (0) target = $region25
    $region24: #{tpu_custom_call.1} parent=1 // pred_region
      %55 = dma.done [#allocation3], 256
    $region25: #{tpu_custom_call.1} parent=1 // pred_fallthru
      _
    // Predicated region
    $region26: #{tpu_custom_call.1} parent=1 // pred_check
      _
    $region27: #{tpu_custom_call.1} parent=1 // pred_check_branch
      %57 = sbr.rel (0) target = $region29
    $region28: #{tpu_custom_call.1} parent=1 // pred_region
      %58 = dma.done [#allocation6], 768
    $region29: #{tpu_custom_call.1} parent=1 // pred_fallthru
      _
    // Predicated region
    $region30: #{tpu_custom_call.1} parent=1 // pred_check
      _
    $region31: #{tpu_custom_call.1} parent=1 // pred_check_branch
      %60 = sbr.rel (0) target = $region33
    $region32: #{tpu_custom_call.1} parent=1 // pred_region
      %61 = dma.done [#allocation6], 768
    $region33: #{tpu_custom_call.1} parent=1 // pred_fallthru
      _
    %v62 = vld [vmem:[#allocation2] sm:$0x3]
    %vm63 = vcmask 130048
    %v64 = vsel %vm63, %v62, 0.0
    %v65 = vld [vmem:[#allocation5] sm:$0xff]
    %v66 = vld [vmem:[#allocation5 + $0x8] sm:$0xff]
    %v67 = vld [vmem:[#allocation5 + $0x10] sm:$0xff]
    %v68 = vld [vmem:[#allocation5 + $0x18] sm:$0xff]
    %v69 = vld [vmem:[#allocation5 + $0x20] sm:$0xff]
    %v70 = vld [vmem:[#allocation5 + $0x28] sm:$0xff]
    %v71 = vld [vmem:[%s2] sm:$0x1]
    %v73 = vlaneseq
    %v74 = vshrl.u32 %v73, 7
    %v75 = vsub.s32 0, %v74
    %v76 = vrot.slane %v71, %v75
    %vm78 = vcmask 392192
    %v80 = vsel %vm78, %v64, 0
    %82 = vmatprep.subr.mxu0 0.0
    %83 = vmatpush1.msra.mxu0 0.0
    %84 = vmatprep.subr.mxu0 0.0
    %85 = vmatpush1.msra.mxu0 0.0
    %86 = vmatprep.subr.mxu0 0.0
    %87 = vmatpush1.msra.mxu0 0.0
    %88 = vmatprep.subr.mxu0 0.0
    %89 = vmatpush1.msra.mxu0 0.0
    %90 = vmatprep.subr.mxu0 0.0
    %91 = vmatpush1.msra.mxu0 0.0
    %92 = vmatprep.subr.mxu0 0.0
    %93 = vmatpush1.msra.mxu0 0.0
    %94 = vmatprep.subr.mxu0 0.0
    %95 = vmatpush1.msra.mxu0 0.0
    %96 = vmatprep.subr.mxu0 0.0
    %97 = vmatpush1.msra.mxu0 0.0
    %98 = vmatprep.subr.mxu0 0.0
    %99 = vmatpush1.msra.mxu0 0.0
    %100 = vmatprep.subr.mxu0 0.0
    %101 = vmatpush1.msra.mxu0 0.0
    %102 = vmatprep.subr.mxu0 0.0
    %103 = vmatpush1.msra.mxu0 %v70
    %104 = vmatprep.subr.mxu0 0.0
    %105 = vmatpush1.msra.mxu0 %v69
    %106 = vmatprep.subr.mxu0 0.0
    %107 = vmatpush1.msra.mxu0 %v68
    %108 = vmatprep.subr.mxu0 0.0
    %109 = vmatpush1.msra.mxu0 %v67
    %110 = vmatprep.subr.mxu0 0.0
    %111 = vmatpush1.msra.mxu0 %v66
    %112 = vmatprep.subr.mxu0 0.0
    %113 = vmatpush1.msra.mxu0 %v65
    %114 = vmatprep.subr.mxu0 0.0
    %115 = vmatpush2.msra.mxu0 0.0
    %116 = vmatprep.subr.mxu0 0.0
    %117 = vmatpush2.msra.mxu0 0.0
    %118 = vmatprep.subr.mxu0 0.0
    %119 = vmatpush2.msra.mxu0 0.0
    %120 = vmatprep.subr.mxu0 0.0
    %121 = vmatpush2.msra.mxu0 0.0
    %122 = vmatprep.subr.mxu0 0.0
    %123 = vmatpush2.msra.mxu0 0.0
    %124 = vmatprep.subr.mxu0 0.0
    %125 = vmatpush2.msra.mxu0 0.0
    %126 = vmatprep.subr.mxu0 0.0
    %127 = vmatpush2.msra.mxu0 0.0
    %128 = vmatprep.subr.mxu0 0.0
    %129 = vmatpush2.msra.mxu0 0.0
    %130 = vmatprep.subr.mxu0 0.0
    %131 = vmatpush2.msra.mxu0 0.0
    %132 = vmatprep.subr.mxu0 0.0
    %133 = vmatpush2.msra.mxu0 0.0
    %134 = vmatprep.subr.mxu0 0.0
    %135 = vmatpush2.msra.mxu0 0.0
    %136 = vmatprep.subr.mxu0 0.0
    %137 = vmatpush2.msra.mxu0 0.0
    %138 = vmatprep.subr.mxu0 0.0
    %139 = vmatpush2.msra.mxu0 0.0
    %140 = vmatprep.subr.mxu0 0.0
    %141 = vmatpush2.msra.mxu0 0.0
    %142 = vmatprep.subr.mxu0 0.0
    %143 = vmatpush2.msra.mxu0 0.0
    %144 = vmatprep.subr.mxu0 0.0
    %145 = vmatpush2.msra.mxu0 0.0
    %146 = vmatprep.mubr.f32.mxu0 0.0
    %147 = vmatmul.mubr.f32.gmra.mxu0 %v80
    %v148 = vpop.f32.mrf.mxu0
    %v149 = vadd.f32 %v76, %v148
    %v150 = vpop.f32.mrf.mxu0
    %151 = vdwg.mxu0
    %v152 = vxor.u32 %v149, 2147483648
    %v153 = vmul.f32 %v152, 1.442695
    %v154 = vpow.pop %v153
    %v155 = vadd.f32 %v154, 1.0
    %v156 = vrcp.pop %v155
    %v157 = vmul.f32 1.0, %v156
    %v158 = vtanh.pop %v149
    %v159 = vmul.f32 %v157, 0.0
    %161 = vrot.lane.b32.xlu0 %v158, 64
    %v162 = vpop.permute.xlu0 %161
    %v164 = vmul.f32 %v157, %v162
    %166 = vrot.lane.b32.xlu0 %v164, 32
    %v167 = vpop.permute.xlu0 %166
    %v169 = vadd.f32 %v159, %v167
    %v170 = vtanh.pop %v169
    %172 = vrot.lane.b32.xlu0 %v170, 64
    %v173 = vpop.permute.xlu0 %172
    %v175 = vmul.f32 %v157, %v173
    %177 = vrot.lane.b32.xlu0 %v175, 32
    %v178 = vpop.permute.xlu0 %177
    %vm180 = vcmask 254976
    %181 = vst.msk [vmem:[#allocation8] sm:$0x3] %vm180, %v178
    %s182 = scalar_lea.vmem [#allocation2], 14
    %v183 = vld [vmem:[%s182] sm:$0x3]
    %v184 = vsel %vm63, %v183, 0.0
    %v185 = vld [vmem:[#allocation7] sm:$0xff]
    %v186 = vld [vmem:[#allocation7 + $0x8] sm:$0xff]
    %v187 = vld [vmem:[#allocation7 + $0x10] sm:$0xff]
    %v188 = vld [vmem:[#allocation7 + $0x18] sm:$0xff]
    %v189 = vld [vmem:[#allocation7 + $0x20] sm:$0xff]
    %v190 = vld [vmem:[#allocation7 + $0x28] sm:$0xff]
    %v191 = vld [vmem:[%s4] sm:$0x1]
    %v193 = vlaneseq
    %v194 = vshrl.u32 %v193, 7
    %v195 = vsub.s32 0, %v194
    %v196 = vrot.slane %v191, %v195
    %v199 = vsel %vm78, %v184, 0
    %201 = vmatprep.subr.mxu0 0.0
    %202 = vmatpush1.msra.mxu0 0.0
    %203 = vmatprep.subr.mxu0 0.0
    %204 = vmatpush1.msra.mxu0 0.0
    %205 = vmatprep.subr.mxu0 0.0
    %206 = vmatpush1.msra.mxu0 0.0
    %207 = vmatprep.subr.mxu0 0.0
    %208 = vmatpush1.msra.mxu0 0.0
    %209 = vmatprep.subr.mxu0 0.0
    %210 = vmatpush1.msra.mxu0 0.0
    %211 = vmatprep.subr.mxu0 0.0
    %212 = vmatpush1.msra.mxu0 0.0
    %213 = vmatprep.subr.mxu0 0.0
    %214 = vmatpush1.msra.mxu0 0.0
    %215 = vmatprep.subr.mxu0 0.0
    %216 = vmatpush1.msra.mxu0 0.0
    %217 = vmatprep.subr.mxu0 0.0
    %218 = vmatpush1.msra.mxu0 0.0
    %219 = vmatprep.subr.mxu0 0.0
    %220 = vmatpush1.msra.mxu0 0.0
    %221 = vmatprep.subr.mxu0 0.0
    %222 = vmatpush1.msra.mxu0 %v190
    %223 = vmatprep.subr.mxu0 0.0
    %224 = vmatpush1.msra.mxu0 %v189
    %225 = vmatprep.subr.mxu0 0.0
    %226 = vmatpush1.msra.mxu0 %v188
    %227 = vmatprep.subr.mxu0 0.0
    %228 = vmatpush1.msra.mxu0 %v187
    %229 = vmatprep.subr.mxu0 0.0
    %230 = vmatpush1.msra.mxu0 %v186
    %231 = vmatprep.subr.mxu0 0.0
    %232 = vmatpush1.msra.mxu0 %v185
    %233 = vmatprep.subr.mxu0 0.0
    %234 = vmatpush2.msra.mxu0 0.0
    %235 = vmatprep.subr.mxu0 0.0
    %236 = vmatpush2.msra.mxu0 0.0
    %237 = vmatprep.subr.mxu0 0.0
    %238 = vmatpush2.msra.mxu0 0.0
    %239 = vmatprep.subr.mxu0 0.0
    %240 = vmatpush2.msra.mxu0 0.0
    %241 = vmatprep.subr.mxu0 0.0
    %242 = vmatpush2.msra.mxu0 0.0
    %243 = vmatprep.subr.mxu0 0.0
    %244 = vmatpush2.msra.mxu0 0.0
    %245 = vmatprep.subr.mxu0 0.0
    %246 = vmatpush2.msra.mxu0 0.0
    %247 = vmatprep.subr.mxu0 0.0
    %248 = vmatpush2.msra.mxu0 0.0
    %249 = vmatprep.subr.mxu0 0.0
    %250 = vmatpush2.msra.mxu0 0.0
    %251 = vmatprep.subr.mxu0 0.0
    %252 = vmatpush2.msra.mxu0 0.0
    %253 = vmatprep.subr.mxu0 0.0
    %254 = vmatpush2.msra.mxu0 0.0
    %255 = vmatprep.subr.mxu0 0.0
    %256 = vmatpush2.msra.mxu0 0.0
    %257 = vmatprep.subr.mxu0 0.0
    %258 = vmatpush2.msra.mxu0 0.0
    %259 = vmatprep.subr.mxu0 0.0
    %260 = vmatpush2.msra.mxu0 0.0
    %261 = vmatprep.subr.mxu0 0.0
    %262 = vmatpush2.msra.mxu0 0.0
    %263 = vmatprep.subr.mxu0 0.0
    %264 = vmatpush2.msra.mxu0 0.0
    %265 = vmatprep.mubr.f32.mxu0 0.0
    %266 = vmatmul.mubr.f32.gmra.mxu0 %v199
    %v267 = vpop.f32.mrf.mxu0
    %v268 = vadd.f32 %v196, %v267
    %v269 = vpop.f32.mrf.mxu0
    %270 = vdwg.mxu0
    %v271 = vxor.u32 %v268, 2147483648
    %v272 = vmul.f32 %v271, 1.442695
    %v273 = vpow.pop %v272
    %v274 = vadd.f32 %v273, 1.0
    %v275 = vrcp.pop %v274
    %v276 = vmul.f32 1.0, %v275
    %v277 = vtanh.pop %v268
    %v278 = vmul.f32 %v276, 0.0
    %280 = vrot.lane.b32.xlu0 %v277, 64
    %v281 = vpop.permute.xlu0 %280
    %v283 = vmul.f32 %v276, %v281
    %285 = vrot.lane.b32.xlu0 %v283, 32
    %v286 = vpop.permute.xlu0 %285
    %v288 = vadd.f32 %v278, %v286
    %v289 = vtanh.pop %v288
    %291 = vrot.lane.b32.xlu0 %v289, 64
    %v292 = vpop.permute.xlu0 %291
    %v294 = vmul.f32 %v276, %v292
    %296 = vrot.lane.b32.xlu0 %v294, 64
    %v297 = vpop.permute.xlu0 %296
    %s299 = scalar_lea.vmem [#allocation8], 14
    %vm300 = vcmask 517376
    %301 = vst.msk [vmem:[%s299] sm:$0x3] %vm300, %v297
    %s302 = scalar_lea.vmem [#allocation2], 2
    %v303 = vld [vmem:[%s302] sm:$0x3]
    %304 = vrot.lane.b32.xlu0 %v175, 48
    %v305 = vpop.permute.xlu0 %304
    %v307 = vsel %vm63, %v303, %v305
    %v308 = vld [vmem:[#allocation5] sm:$0xff]
    %v309 = vld [vmem:[#allocation5 + $0x8] sm:$0xff]
    %v310 = vld [vmem:[#allocation5 + $0x10] sm:$0xff]
    %v311 = vld [vmem:[#allocation5 + $0x18] sm:$0xff]
    %v312 = vld [vmem:[#allocation5 + $0x20] sm:$0xff]
    %v313 = vld [vmem:[#allocation5 + $0x28] sm:$0xff]
    %v314 = vld [vmem:[%s2] sm:$0x1]
    %v316 = vlaneseq
    %v317 = vshrl.u32 %v316, 7
    %v318 = vsub.s32 0, %v317
    %v319 = vrot.slane %v314, %v318
    %v322 = vsel %vm78, %v307, 0
    %324 = vmatprep.subr.mxu0 0.0
    %325 = vmatpush1.msra.mxu0 0.0
    %326 = vmatprep.subr.mxu0 0.0
    %327 = vmatpush1.msra.mxu0 0.0
    %328 = vmatprep.subr.mxu0 0.0
    %329 = vmatpush1.msra.mxu0 0.0
    %330 = vmatprep.subr.mxu0 0.0
    %331 = vmatpush1.msra.mxu0 0.0
    %332 = vmatprep.subr.mxu0 0.0
    %333 = vmatpush1.msra.mxu0 0.0
    %334 = vmatprep.subr.mxu0 0.0
    %335 = vmatpush1.msra.mxu0 0.0
    %336 = vmatprep.subr.mxu0 0.0
    %337 = vmatpush1.msra.mxu0 0.0
    %338 = vmatprep.subr.mxu0 0.0
    %339 = vmatpush1.msra.mxu0 0.0
    %340 = vmatprep.subr.mxu0 0.0
    %341 = vmatpush1.msra.mxu0 0.0
    %342 = vmatprep.subr.mxu0 0.0
    %343 = vmatpush1.msra.mxu0 0.0
    %344 = vmatprep.subr.mxu0 0.0
    %345 = vmatpush1.msra.mxu0 %v313
    %346 = vmatprep.subr.mxu0 0.0
    %347 = vmatpush1.msra.mxu0 %v312
    %348 = vmatprep.subr.mxu0 0.0
    %349 = vmatpush1.msra.mxu0 %v311
    %350 = vmatprep.subr.mxu0 0.0
    %351 = vmatpush1.msra.mxu0 %v310
    %352 = vmatprep.subr.mxu0 0.0
    %353 = vmatpush1.msra.mxu0 %v309
    %354 = vmatprep.subr.mxu0 0.0
    %355 = vmatpush1.msra.mxu0 %v308
    %356 = vmatprep.subr.mxu0 0.0
    %357 = vmatpush2.msra.mxu0 0.0
    %358 = vmatprep.subr.mxu0 0.0
    %359 = vmatpush2.msra.mxu0 0.0
    %360 = vmatprep.subr.mxu0 0.0
    %361 = vmatpush2.msra.mxu0 0.0
    %362 = vmatprep.subr.mxu0 0.0
    %363 = vmatpush2.msra.mxu0 0.0
    %364 = vmatprep.subr.mxu0 0.0
    %365 = vmatpush2.msra.mxu0 0.0
    %366 = vmatprep.subr.mxu0 0.0
    %367 = vmatpush2.msra.mxu0 0.0
    %368 = vmatprep.subr.mxu0 0.0
    %369 = vmatpush2.msra.mxu0 0.0
    %370 = vmatprep.subr.mxu0 0.0
    %371 = vmatpush2.msra.mxu0 0.0
    %372 = vmatprep.subr.mxu0 0.0
    %373 = vmatpush2.msra.mxu0 0.0
    %374 = vmatprep.subr.mxu0 0.0
    %375 = vmatpush2.msra.mxu0 0.0
    %376 = vmatprep.subr.mxu0 0.0
    %377 = vmatpush2.msra.mxu0 0.0
    %378 = vmatprep.subr.mxu0 0.0
    %379 = vmatpush2.msra.mxu0 0.0
    %380 = vmatprep.subr.mxu0 0.0
    %381 = vmatpush2.msra.mxu0 0.0
    %382 = vmatprep.subr.mxu0 0.0
    %383 = vmatpush2.msra.mxu0 0.0
    %384 = vmatprep.subr.mxu0 0.0
    %385 = vmatpush2.msra.mxu0 0.0
    %386 = vmatprep.subr.mxu0 0.0
    %387 = vmatpush2.msra.mxu0 0.0
    %388 = vmatprep.mubr.f32.mxu0 0.0
    %389 = vmatmul.mubr.f32.gmra.mxu0 %v322
    %v390 = vpop.f32.mrf.mxu0
    %v391 = vadd.f32 %v319, %v390
    %v392 = vpop.f32.mrf.mxu0
    %393 = vdwg.mxu0
    %v394 = vxor.u32 %v391, 2147483648
    %v395 = vmul.f32 %v394, 1.442695
    %v396 = vpow.pop %v395
    %v397 = vadd.f32 %v396, 1.0
    %v398 = vrcp.pop %v397
    %v399 = vmul.f32 1.0, %v398
    %v400 = vtanh.pop %v391
    %v401 = vmul.f32 %v399, %v169
    %403 = vrot.lane.b32.xlu0 %v400, 64
    %v404 = vpop.permute.xlu0 %403
    %v406 = vmul.f32 %v399, %v404
    %408 = vrot.lane.b32.xlu0 %v406, 32
    %v409 = vpop.permute.xlu0 %408
    %v411 = vadd.f32 %v401, %v409
    %v412 = vtanh.pop %v411
    %414 = vrot.lane.b32.xlu0 %v412, 64
    %v415 = vpop.permute.xlu0 %414
    %v417 = vmul.f32 %v399, %v415
    %419 = vrot.lane.b32.xlu0 %v417, 32
    %v420 = vpop.permute.xlu0 %419
    %s422 = scalar_lea.vmem [#allocation8], 2
    %423 = vst.msk [vmem:[%s422] sm:$0x3] %vm180, %v420
    %s424 = scalar_lea.vmem [#allocation2], 12
    %v425 = vld [vmem:[%s424] sm:$0x3]
    %426 = vrot.lane.b32.xlu0 %v294, 48
    %v427 = vpop.permute.xlu0 %426
    %v429 = vsel %vm63, %v425, %v427
    %v430 = vld [vmem:[#allocation7] sm:$0xff]
    %v431 = vld [vmem:[#allocation7 + $0x8] sm:$0xff]
    %v432 = vld [vmem:[#allocation7 + $0x10] sm:$0xff]
    %v433 = vld [vmem:[#allocation7 + $0x18] sm:$0xff]
    %v434 = vld [vmem:[#allocation7 + $0x20] sm:$0xff]
    %v435 = vld [vmem:[#allocation7 + $0x28] sm:$0xff]
    %v436 = vld [vmem:[%s4] sm:$0x1]
    %v438 = vlaneseq
    %v439 = vshrl.u32 %v438, 7
    %v440 = vsub.s32 0, %v439
    %v441 = vrot.slane %v436, %v440
    %v444 = vsel %vm78, %v429, 0
    %446 = vmatprep.subr.mxu0 0.0
    %447 = vmatpush1.msra.mxu0 0.0
    %448 = vmatprep.subr.mxu0 0.0
    %449 = vmatpush1.msra.mxu0 0.0
    %450 = vmatprep.subr.mxu0 0.0
    %451 = vmatpush1.msra.mxu0 0.0
    %452 = vmatprep.subr.mxu0 0.0
    %453 = vmatpush1.msra.mxu0 0.0
    %454 = vmatprep.subr.mxu0 0.0
    %455 = vmatpush1.msra.mxu0 0.0
    %456 = vmatprep.subr.mxu0 0.0
    %457 = vmatpush1.msra.mxu0 0.0
    %458 = vmatprep.subr.mxu0 0.0
    %459 = vmatpush1.msra.mxu0 0.0
    %460 = vmatprep.subr.mxu0 0.0
    %461 = vmatpush1.msra.mxu0 0.0
    %462 = vmatprep.subr.mxu0 0.0
    %463 = vmatpush1.msra.mxu0 0.0
    %464 = vmatprep.subr.mxu0 0.0
    %465 = vmatpush1.msra.mxu0 0.0
    %466 = vmatprep.subr.mxu0 0.0
    %467 = vmatpush1.msra.mxu0 %v435
    %468 = vmatprep.subr.mxu0 0.0
    %469 = vmatpush1.msra.mxu0 %v434
    %470 = vmatprep.subr.mxu0 0.0
    %471 = vmatpush1.msra.mxu0 %v433
    %472 = vmatprep.subr.mxu0 0.0
    %473 = vmatpush1.msra.mxu0 %v432
    %474 = vmatprep.subr.mxu0 0.0
    %475 = vmatpush1.msra.mxu0 %v431
    %476 = vmatprep.subr.mxu0 0.0
    %477 = vmatpush1.msra.mxu0 %v430
    %478 = vmatprep.subr.mxu0 0.0
    %479 = vmatpush2.msra.mxu0 0.0
    %480 = vmatprep.subr.mxu0 0.0
    %481 = vmatpush2.msra.mxu0 0.0
    %482 = vmatprep.subr.mxu0 0.0
    %483 = vmatpush2.msra.mxu0 0.0
    %484 = vmatprep.subr.mxu0 0.0
    %485 = vmatpush2.msra.mxu0 0.0
    %486 = vmatprep.subr.mxu0 0.0
    %487 = vmatpush2.msra.mxu0 0.0
    %488 = vmatprep.subr.mxu0 0.0
    %489 = vmatpush2.msra.mxu0 0.0
    %490 = vmatprep.subr.mxu0 0.0
    %491 = vmatpush2.msra.mxu0 0.0
    %492 = vmatprep.subr.mxu0 0.0
    %493 = vmatpush2.msra.mxu0 0.0
    %494 = vmatprep.subr.mxu0 0.0
    %495 = vmatpush2.msra.mxu0 0.0
    %496 = vmatprep.subr.mxu0 0.0
    %497 = vmatpush2.msra.mxu0 0.0
    %498 = vmatprep.subr.mxu0 0.0
    %499 = vmatpush2.msra.mxu0 0.0
    %500 = vmatprep.subr.mxu0 0.0
    %501 = vmatpush2.msra.mxu0 0.0
    %502 = vmatprep.subr.mxu0 0.0
    %503 = vmatpush2.msra.mxu0 0.0
    %504 = vmatprep.subr.mxu0 0.0
    %505 = vmatpush2.msra.mxu0 0.0
    %506 = vmatprep.subr.mxu0 0.0
    %507 = vmatpush2.msra.mxu0 0.0
    %508 = vmatprep.subr.mxu0 0.0
    %509 = vmatpush2.msra.mxu0 0.0
    %510 = vmatprep.mubr.f32.mxu0 0.0
    %511 = vmatmul.mubr.f32.gmra.mxu0 %v444
    %v512 = vpop.f32.mrf.mxu0
    %v513 = vadd.f32 %v441, %v512
    %v514 = vpop.f32.mrf.mxu0
    %515 = vdwg.mxu0
    %v516 = vxor.u32 %v513, 2147483648
    %v517 = vmul.f32 %v516, 1.442695
    %v518 = vpow.pop %v517
    %v519 = vadd.f32 %v518, 1.0
    %v520 = vrcp.pop %v519
    %v521 = vmul.f32 1.0, %v520
    %v522 = vtanh.pop %v513
    %v523 = vmul.f32 %v521, %v288
    %525 = vrot.lane.b32.xlu0 %v522, 64
    %v526 = vpop.permute.xlu0 %525
    %v528 = vmul.f32 %v521, %v526
    %530 = vrot.lane.b32.xlu0 %v528, 32
    %v531 = vpop.permute.xlu0 %530
    %v533 = vadd.f32 %v523, %v531
    %v534 = vtanh.pop %v533
    %536 = vrot.lane.b32.xlu0 %v534, 64
    %v537 = vpop.permute.xlu0 %536
    %v539 = vmul.f32 %v521, %v537
    %541 = vrot.lane.b32.xlu0 %v539, 64
    %v542 = vpop.permute.xlu0 %541
    %s544 = scalar_lea.vmem [#allocation8], 12
    %545 = vst.msk [vmem:[%s544] sm:$0x3] %vm300, %v542
    %s546 = scalar_lea.vmem [#allocation2], 4
    %v547 = vld [vmem:[%s546] sm:$0x3]
    %548 = vrot.lane.b32.xlu0 %v417, 48
    %v549 = vpop.permute.xlu0 %548
    %v551 = vsel %vm63, %v547, %v549
    %v552 = vld [vmem:[#allocation5] sm:$0xff]
    %v553 = vld [vmem:[#allocation5 + $0x8] sm:$0xff]
    %v554 = vld [vmem:[#allocation5 + $0x10] sm:$0xff]
    %v555 = vld [vmem:[#allocation5 + $0x18] sm:$0xff]
    %v556 = vld [vmem:[#allocation5 + $0x20] sm:$0xff]
    %v557 = vld [vmem:[#allocation5 + $0x28] sm:$0xff]
    %v558 = vld [vmem:[%s2] sm:$0x1]
    %v560 = vlaneseq
    %v561 = vshrl.u32 %v560, 7
    %v562 = vsub.s32 0, %v561
    %v563 = vrot.slane %v558, %v562
    %v566 = vsel %vm78, %v551, 0
    %568 = vmatprep.subr.mxu0 0.0
    %569 = vmatpush1.msra.mxu0 0.0
    %570 = vmatprep.subr.mxu0 0.0
    %571 = vmatpush1.msra.mxu0 0.0
    %572 = vmatprep.subr.mxu0 0.0
    %573 = vmatpush1.msra.mxu0 0.0
    %574 = vmatprep.subr.mxu0 0.0
    %575 = vmatpush1.msra.mxu0 0.0
    %576 = vmatprep.subr.mxu0 0.0
    %577 = vmatpush1.msra.mxu0 0.0
    %578 = vmatprep.subr.mxu0 0.0
    %579 = vmatpush1.msra.mxu0 0.0
    %580 = vmatprep.subr.mxu0 0.0
    %581 = vmatpush1.msra.mxu0 0.0
    %582 = vmatprep.subr.mxu0 0.0
    %583 = vmatpush1.msra.mxu0 0.0
    %584 = vmatprep.subr.mxu0 0.0
    %585 = vmatpush1.msra.mxu0 0.0
    %586 = vmatprep.subr.mxu0 0.0
    %587 = vmatpush1.msra.mxu0 0.0
    %588 = vmatprep.subr.mxu0 0.0
    %589 = vmatpush1.msra.mxu0 %v557
    %590 = vmatprep.subr.mxu0 0.0
    %591 = vmatpush1.msra.mxu0 %v556
    %592 = vmatprep.subr.mxu0 0.0
    %593 = vmatpush1.msra.mxu0 %v555
    %594 = vmatprep.subr.mxu0 0.0
    %595 = vmatpush1.msra.mxu0 %v554
    %596 = vmatprep.subr.mxu0 0.0
    %597 = vmatpush1.msra.mxu0 %v553
    %598 = vmatprep.subr.mxu0 0.0
    %599 = vmatpush1.msra.mxu0 %v552
    %600 = vmatprep.subr.mxu0 0.0
    %601 = vmatpush2.msra.mxu0 0.0
    %602 = vmatprep.subr.mxu0 0.0
    %603 = vmatpush2.msra.mxu0 0.0
    %604 = vmatprep.subr.mxu0 0.0
    %605 = vmatpush2.msra.mxu0 0.0
    %606 = vmatprep.subr.mxu0 0.0
    %607 = vmatpush2.msra.mxu0 0.0
    %608 = vmatprep.subr.mxu0 0.0
    %609 = vmatpush2.msra.mxu0 0.0
    %610 = vmatprep.subr.mxu0 0.0
    %611 = vmatpush2.msra.mxu0 0.0
    %612 = vmatprep.subr.mxu0 0.0
    %613 = vmatpush2.msra.mxu0 0.0
    %614 = vmatprep.subr.mxu0 0.0
    %615 = vmatpush2.msra.mxu0 0.0
    %616 = vmatprep.subr.mxu0 0.0
    %617 = vmatpush2.msra.mxu0 0.0
    %618 = vmatprep.subr.mxu0 0.0
    %619 = vmatpush2.msra.mxu0 0.0
    %620 = vmatprep.subr.mxu0 0.0
    %621 = vmatpush2.msra.mxu0 0.0
    %622 = vmatprep.subr.mxu0 0.0
    %623 = vmatpush2.msra.mxu0 0.0
    %624 = vmatprep.subr.mxu0 0.0
    %625 = vmatpush2.msra.mxu0 0.0
    %626 = vmatprep.subr.mxu0 0.0
    %627 = vmatpush2.msra.mxu0 0.0
    %628 = vmatprep.subr.mxu0 0.0
    %629 = vmatpush2.msra.mxu0 0.0
    %630 = vmatprep.subr.mxu0 0.0
    %631 = vmatpush2.msra.mxu0 0.0
    %632 = vmatprep.mubr.f32.mxu0 0.0
    %633 = vmatmul.mubr.f32.gmra.mxu0 %v566
    %v634 = vpop.f32.mrf.mxu0
    %v635 = vadd.f32 %v563, %v634
    %v636 = vpop.f32.mrf.mxu0
    %637 = vdwg.mxu0
    %v638 = vxor.u32 %v635, 2147483648
    %v639 = vmul.f32 %v638, 1.442695
    %v640 = vpow.pop %v639
    %v641 = vadd.f32 %v640, 1.0
    %v642 = vrcp.pop %v641
    %v643 = vmul.f32 1.0, %v642
    %v644 = vtanh.pop %v635
    %v645 = vmul.f32 %v643, %v411
    %647 = vrot.lane.b32.xlu0 %v644, 64
    %v648 = vpop.permute.xlu0 %647
    %v650 = vmul.f32 %v643, %v648
    %652 = vrot.lane.b32.xlu0 %v650, 32
    %v653 = vpop.permute.xlu0 %652
    %v655 = vadd.f32 %v645, %v653
    %v656 = vtanh.pop %v655
    %658 = vrot.lane.b32.xlu0 %v656, 64
    %v659 = vpop.permute.xlu0 %658
    %v661 = vmul.f32 %v643, %v659
    %663 = vrot.lane.b32.xlu0 %v661, 32
    %v664 = vpop.permute.xlu0 %663
    %s666 = scalar_lea.vmem [#allocation8], 4
    %667 = vst.msk [vmem:[%s666] sm:$0x3] %vm180, %v664
    %s668 = scalar_lea.vmem [#allocation2], 10
    %v669 = vld [vmem:[%s668] sm:$0x3]
    %670 = vrot.lane.b32.xlu0 %v539, 48
    %v671 = vpop.permute.xlu0 %670
    %v673 = vsel %vm63, %v669, %v671
    %v674 = vld [vmem:[#allocation7] sm:$0xff]
    %v675 = vld [vmem:[#allocation7 + $0x8] sm:$0xff]
    %v676 = vld [vmem:[#allocation7 + $0x10] sm:$0xff]
    %v677 = vld [vmem:[#allocation7 + $0x18] sm:$0xff]
    %v678 = vld [vmem:[#allocation7 + $0x20] sm:$0xff]
    %v679 = vld [vmem:[#allocation7 + $0x28] sm:$0xff]
    %v680 = vld [vmem:[%s4] sm:$0x1]
    %v682 = vlaneseq
    %v683 = vshrl.u32 %v682, 7
    %v684 = vsub.s32 0, %v683
    %v685 = vrot.slane %v680, %v684
    %v688 = vsel %vm78, %v673, 0
    %690 = vmatprep.subr.mxu0 0.0
    %691 = vmatpush1.msra.mxu0 0.0
    %692 = vmatprep.subr.mxu0 0.0
    %693 = vmatpush1.msra.mxu0 0.0
    %694 = vmatprep.subr.mxu0 0.0
    %695 = vmatpush1.msra.mxu0 0.0
    %696 = vmatprep.subr.mxu0 0.0
    %697 = vmatpush1.msra.mxu0 0.0
    %698 = vmatprep.subr.mxu0 0.0
    %699 = vmatpush1.msra.mxu0 0.0
    %700 = vmatprep.subr.mxu0 0.0
    %701 = vmatpush1.msra.mxu0 0.0
    %702 = vmatprep.subr.mxu0 0.0
    %703 = vmatpush1.msra.mxu0 0.0
    %704 = vmatprep.subr.mxu0 0.0
    %705 = vmatpush1.msra.mxu0 0.0
    %706 = vmatprep.subr.mxu0 0.0
    %707 = vmatpush1.msra.mxu0 0.0
    %708 = vmatprep.subr.mxu0 0.0
    %709 = vmatpush1.msra.mxu0 0.0
    %710 = vmatprep.subr.mxu0 0.0
    %711 = vmatpush1.msra.mxu0 %v679
    %712 = vmatprep.subr.mxu0 0.0
    %713 = vmatpush1.msra.mxu0 %v678
    %714 = vmatprep.subr.mxu0 0.0
    %715 = vmatpush1.msra.mxu0 %v677
    %716 = vmatprep.subr.mxu0 0.0
    %717 = vmatpush1.msra.mxu0 %v676
    %718 = vmatprep.subr.mxu0 0.0
    %719 = vmatpush1.msra.mxu0 %v675
    %720 = vmatprep.subr.mxu0 0.0
    %721 = vmatpush1.msra.mxu0 %v674
    %722 = vmatprep.subr.mxu0 0.0
    %723 = vmatpush2.msra.mxu0 0.0
    %724 = vmatprep.subr.mxu0 0.0
    %725 = vmatpush2.msra.mxu0 0.0
    %726 = vmatprep.subr.mxu0 0.0
    %727 = vmatpush2.msra.mxu0 0.0
    %728 = vmatprep.subr.mxu0 0.0
    %729 = vmatpush2.msra.mxu0 0.0
    %730 = vmatprep.subr.mxu0 0.0
    %731 = vmatpush2.msra.mxu0 0.0
    %732 = vmatprep.subr.mxu0 0.0
    %733 = vmatpush2.msra.mxu0 0.0
    %734 = vmatprep.subr.mxu0 0.0
    %735 = vmatpush2.msra.mxu0 0.0
    %736 = vmatprep.subr.mxu0 0.0
    %737 = vmatpush2.msra.mxu0 0.0
    %738 = vmatprep.subr.mxu0 0.0
    %739 = vmatpush2.msra.mxu0 0.0
    %740 = vmatprep.subr.mxu0 0.0
    %741 = vmatpush2.msra.mxu0 0.0
    %742 = vmatprep.subr.mxu0 0.0
    %743 = vmatpush2.msra.mxu0 0.0
    %744 = vmatprep.subr.mxu0 0.0
    %745 = vmatpush2.msra.mxu0 0.0
    %746 = vmatprep.subr.mxu0 0.0
    %747 = vmatpush2.msra.mxu0 0.0
    %748 = vmatprep.subr.mxu0 0.0
    %749 = vmatpush2.msra.mxu0 0.0
    %750 = vmatprep.subr.mxu0 0.0
    %751 = vmatpush2.msra.mxu0 0.0
    %752 = vmatprep.subr.mxu0 0.0
    %753 = vmatpush2.msra.mxu0 0.0
    %754 = vmatprep.mubr.f32.mxu0 0.0
    %755 = vmatmul.mubr.f32.gmra.mxu0 %v688
    %v756 = vpop.f32.mrf.mxu0
    %v757 = vadd.f32 %v685, %v756
    %v758 = vpop.f32.mrf.mxu0
    %759 = vdwg.mxu0
    %v760 = vxor.u32 %v757, 2147483648
    %v761 = vmul.f32 %v760, 1.442695
    %v762 = vpow.pop %v761
    %v763 = vadd.f32 %v762, 1.0
    %v764 = vrcp.pop %v763
    %v765 = vmul.f32 1.0, %v764
    %v766 = vtanh.pop %v757
    %v767 = vmul.f32 %v765, %v533
    %769 = vrot.lane.b32.xlu0 %v766, 64
    %v770 = vpop.permute.xlu0 %769
    %v772 = vmul.f32 %v765, %v770
    %774 = vrot.lane.b32.xlu0 %v772, 32
    %v775 = vpop.permute.xlu0 %774
    %v777 = vadd.f32 %v767, %v775
    %v778 = vtanh.pop %v777
    %780 = vrot.lane.b32.xlu0 %v778, 64
    %v781 = vpop.permute.xlu0 %780
    %v783 = vmul.f32 %v765, %v781
    %785 = vrot.lane.b32.xlu0 %v783, 64
    %v786 = vpop.permute.xlu0 %785
    %s788 = scalar_lea.vmem [#allocation8], 10
    %789 = vst.msk [vmem:[%s788] sm:$0x3] %vm300, %v786
    %s790 = scalar_lea.vmem [#allocation2], 6
    %v791 = vld [vmem:[%s790] sm:$0x3]
    %792 = vrot.lane.b32.xlu0 %v661, 48
    %v793 = vpop.permute.xlu0 %792
    %v795 = vsel %vm63, %v791, %v793
    %v796 = vld [vmem:[#allocation5] sm:$0xff]
    %v797 = vld [vmem:[#allocation5 + $0x8] sm:$0xff]
    %v798 = vld [vmem:[#allocation5 + $0x10] sm:$0xff]
    %v799 = vld [vmem:[#allocation5 + $0x18] sm:$0xff]
    %v800 = vld [vmem:[#allocation5 + $0x20] sm:$0xff]
    %v801 = vld [vmem:[#allocation5 + $0x28] sm:$0xff]
    %v802 = vld [vmem:[%s2] sm:$0x1]
    %v804 = vlaneseq
    %v805 = vshrl.u32 %v804, 7
    %v806 = vsub.s32 0, %v805
    %v807 = vrot.slane %v802, %v806
    %v810 = vsel %vm78, %v795, 0
    %812 = vmatprep.subr.mxu0 0.0
    %813 = vmatpush1.msra.mxu0 0.0
    %814 = vmatprep.subr.mxu0 0.0
    %815 = vmatpush1.msra.mxu0 0.0
    %816 = vmatprep.subr.mxu0 0.0
    %817 = vmatpush1.msra.mxu0 0.0
    %818 = vmatprep.subr.mxu0 0.0
    %819 = vmatpush1.msra.mxu0 0.0
    %820 = vmatprep.subr.mxu0 0.0
    %821 = vmatpush1.msra.mxu0 0.0
    %822 = vmatprep.subr.mxu0 0.0
    %823 = vmatpush1.msra.mxu0 0.0
    %824 = vmatprep.subr.mxu0 0.0
    %825 = vmatpush1.msra.mxu0 0.0
    %826 = vmatprep.subr.mxu0 0.0
    %827 = vmatpush1.msra.mxu0 0.0
    %828 = vmatprep.subr.mxu0 0.0
    %829 = vmatpush1.msra.mxu0 0.0
    %830 = vmatprep.subr.mxu0 0.0
    %831 = vmatpush1.msra.mxu0 0.0
    %832 = vmatprep.subr.mxu0 0.0
    %833 = vmatpush1.msra.mxu0 %v801
    %834 = vmatprep.subr.mxu0 0.0
    %835 = vmatpush1.msra.mxu0 %v800
    %836 = vmatprep.subr.mxu0 0.0
    %837 = vmatpush1.msra.mxu0 %v799
    %838 = vmatprep.subr.mxu0 0.0
    %839 = vmatpush1.msra.mxu0 %v798
    %840 = vmatprep.subr.mxu0 0.0
    %841 = vmatpush1.msra.mxu0 %v797
    %842 = vmatprep.subr.mxu0 0.0
    %843 = vmatpush1.msra.mxu0 %v796
    %844 = vmatprep.subr.mxu0 0.0
    %845 = vmatpush2.msra.mxu0 0.0
    %846 = vmatprep.subr.mxu0 0.0
    %847 = vmatpush2.msra.mxu0 0.0
    %848 = vmatprep.subr.mxu0 0.0
    %849 = vmatpush2.msra.mxu0 0.0
    %850 = vmatprep.subr.mxu0 0.0
    %851 = vmatpush2.msra.mxu0 0.0
    %852 = vmatprep.subr.mxu0 0.0
    %853 = vmatpush2.msra.mxu0 0.0
    %854 = vmatprep.subr.mxu0 0.0
    %855 = vmatpush2.msra.mxu0 0.0
    %856 = vmatprep.subr.mxu0 0.0
    %857 = vmatpush2.msra.mxu0 0.0
    %858 = vmatprep.subr.mxu0 0.0
    %859 = vmatpush2.msra.mxu0 0.0
    %860 = vmatprep.subr.mxu0 0.0
    %861 = vmatpush2.msra.mxu0 0.0
    %862 = vmatprep.subr.mxu0 0.0
    %863 = vmatpush2.msra.mxu0 0.0
    %864 = vmatprep.subr.mxu0 0.0
    %865 = vmatpush2.msra.mxu0 0.0
    %866 = vmatprep.subr.mxu0 0.0
    %867 = vmatpush2.msra.mxu0 0.0
    %868 = vmatprep.subr.mxu0 0.0
    %869 = vmatpush2.msra.mxu0 0.0
    %870 = vmatprep.subr.mxu0 0.0
    %871 = vmatpush2.msra.mxu0 0.0
    %872 = vmatprep.subr.mxu0 0.0
    %873 = vmatpush2.msra.mxu0 0.0
    %874 = vmatprep.subr.mxu0 0.0
    %875 = vmatpush2.msra.mxu0 0.0
    %876 = vmatprep.mubr.f32.mxu0 0.0
    %877 = vmatmul.mubr.f32.gmra.mxu0 %v810
    %v878 = vpop.f32.mrf.mxu0
    %v879 = vadd.f32 %v807, %v878
    %v880 = vpop.f32.mrf.mxu0
    %881 = vdwg.mxu0
    %v882 = vxor.u32 %v879, 2147483648
    %v883 = vmul.f32 %v882, 1.442695
    %v884 = vpow.pop %v883
    %v885 = vadd.f32 %v884, 1.0
    %v886 = vrcp.pop %v885
    %v887 = vmul.f32 1.0, %v886
    %v888 = vtanh.pop %v879
    %v889 = vmul.f32 %v887, %v655
    %891 = vrot.lane.b32.xlu0 %v888, 64
    %v892 = vpop.permute.xlu0 %891
    %v894 = vmul.f32 %v887, %v892
    %896 = vrot.lane.b32.xlu0 %v894, 32
    %v897 = vpop.permute.xlu0 %896
    %v899 = vadd.f32 %v889, %v897
    %v900 = vtanh.pop %v899
    %902 = vrot.lane.b32.xlu0 %v900, 64
    %v903 = vpop.permute.xlu0 %902
    %v905 = vmul.f32 %v887, %v903
    %907 = vrot.lane.b32.xlu0 %v905, 32
    %v908 = vpop.permute.xlu0 %907
    %s910 = scalar_lea.vmem [#allocation8], 6
    %911 = vst.msk [vmem:[%s910] sm:$0x3] %vm180, %v908
    %s912 = scalar_lea.vmem [#allocation2], 8
    %v913 = vld [vmem:[%s912] sm:$0x3]
    %914 = vrot.lane.b32.xlu0 %v783, 48
    %v915 = vpop.permute.xlu0 %914
    %v917 = vsel %vm63, %v913, %v915
    %v918 = vld [vmem:[#allocation7] sm:$0xff]
    %v919 = vld [vmem:[#allocation7 + $0x8] sm:$0xff]
    %v920 = vld [vmem:[#allocation7 + $0x10] sm:$0xff]
    %v921 = vld [vmem:[#allocation7 + $0x18] sm:$0xff]
    %v922 = vld [vmem:[#allocation7 + $0x20] sm:$0xff]
    %v923 = vld [vmem:[#allocation7 + $0x28] sm:$0xff]
    %v924 = vld [vmem:[%s4] sm:$0x1]
    %v926 = vlaneseq
    %v927 = vshrl.u32 %v926, 7
    %v928 = vsub.s32 0, %v927
    %v929 = vrot.slane %v924, %v928
    %v932 = vsel %vm78, %v917, 0
    %934 = vmatprep.subr.mxu0 0.0
    %935 = vmatpush1.msra.mxu0 0.0
    %936 = vmatprep.subr.mxu0 0.0
    %937 = vmatpush1.msra.mxu0 0.0
    %938 = vmatprep.subr.mxu0 0.0
    %939 = vmatpush1.msra.mxu0 0.0
    %940 = vmatprep.subr.mxu0 0.0
    %941 = vmatpush1.msra.mxu0 0.0
    %942 = vmatprep.subr.mxu0 0.0
    %943 = vmatpush1.msra.mxu0 0.0
    %944 = vmatprep.subr.mxu0 0.0
    %945 = vmatpush1.msra.mxu0 0.0
    %946 = vmatprep.subr.mxu0 0.0
    %947 = vmatpush1.msra.mxu0 0.0
    %948 = vmatprep.subr.mxu0 0.0
    %949 = vmatpush1.msra.mxu0 0.0
    %950 = vmatprep.subr.mxu0 0.0
    %951 = vmatpush1.msra.mxu0 0.0
    %952 = vmatprep.subr.mxu0 0.0
    %953 = vmatpush1.msra.mxu0 0.0
    %954 = vmatprep.subr.mxu0 0.0
    %955 = vmatpush1.msra.mxu0 %v923
    %956 = vmatprep.subr.mxu0 0.0
    %957 = vmatpush1.msra.mxu0 %v922
    %958 = vmatprep.subr.mxu0 0.0
    %959 = vmatpush1.msra.mxu0 %v921
    %960 = vmatprep.subr.mxu0 0.0
    %961 = vmatpush1.msra.mxu0 %v920
    %962 = vmatprep.subr.mxu0 0.0
    %963 = vmatpush1.msra.mxu0 %v919
    %964 = vmatprep.subr.mxu0 0.0
    %965 = vmatpush1.msra.mxu0 %v918
    %966 = vmatprep.subr.mxu0 0.0
    %967 = vmatpush2.msra.mxu0 0.0
    %968 = vmatprep.subr.mxu0 0.0
    %969 = vmatpush2.msra.mxu0 0.0
    %970 = vmatprep.subr.mxu0 0.0
    %971 = vmatpush2.msra.mxu0 0.0
    %972 = vmatprep.subr.mxu0 0.0
    %973 = vmatpush2.msra.mxu0 0.0
    %974 = vmatprep.subr.mxu0 0.0
    %975 = vmatpush2.msra.mxu0 0.0
    %976 = vmatprep.subr.mxu0 0.0
    %977 = vmatpush2.msra.mxu0 0.0
    %978 = vmatprep.subr.mxu0 0.0
    %979 = vmatpush2.msra.mxu0 0.0
    %980 = vmatprep.subr.mxu0 0.0
    %981 = vmatpush2.msra.mxu0 0.0
    %982 = vmatprep.subr.mxu0 0.0
    %983 = vmatpush2.msra.mxu0 0.0
    %984 = vmatprep.subr.mxu0 0.0
    %985 = vmatpush2.msra.mxu0 0.0
    %986 = vmatprep.subr.mxu0 0.0
    %987 = vmatpush2.msra.mxu0 0.0
    %988 = vmatprep.subr.mxu0 0.0
    %989 = vmatpush2.msra.mxu0 0.0
    %990 = vmatprep.subr.mxu0 0.0
    %991 = vmatpush2.msra.mxu0 0.0
    %992 = vmatprep.subr.mxu0 0.0
    %993 = vmatpush2.msra.mxu0 0.0
    %994 = vmatprep.subr.mxu0 0.0
    %995 = vmatpush2.msra.mxu0 0.0
    %996 = vmatprep.subr.mxu0 0.0
    %997 = vmatpush2.msra.mxu0 0.0
    %998 = vmatprep.mubr.f32.mxu0 0.0
    %999 = vmatmul.mubr.f32.gmra.mxu0 %v932
    %v1000 = vpop.f32.mrf.mxu0
    %v1001 = vadd.f32 %v929, %v1000
    %v1002 = vpop.f32.mrf.mxu0
    %1003 = vdwg.mxu0
    %v1004 = vxor.u32 %v1001, 2147483648
    %v1005 = vmul.f32 %v1004, 1.442695
    %v1006 = vpow.pop %v1005
    %v1007 = vadd.f32 %v1006, 1.0
    %v1008 = vrcp.pop %v1007
    %v1009 = vmul.f32 1.0, %v1008
    %v1010 = vtanh.pop %v1001
    %v1011 = vmul.f32 %v1009, %v777
    %1013 = vrot.lane.b32.xlu0 %v1010, 64
    %v1014 = vpop.permute.xlu0 %1013
    %v1016 = vmul.f32 %v1009, %v1014
    %1018 = vrot.lane.b32.xlu0 %v1016, 32
    %v1019 = vpop.permute.xlu0 %1018
    %v1021 = vadd.f32 %v1011, %v1019
    %v1022 = vtanh.pop %v1021
    %1024 = vrot.lane.b32.xlu0 %v1022, 64
    %v1025 = vpop.permute.xlu0 %1024
    %v1027 = vmul.f32 %v1009, %v1025
    %1029 = vrot.lane.b32.xlu0 %v1027, 64
    %v1030 = vpop.permute.xlu0 %1029
    %s1032 = scalar_lea.vmem [#allocation8], 8
    %1033 = vst.msk [vmem:[%s1032] sm:$0x3] %vm300, %v1030
    %v1034 = vld [vmem:[%s912] sm:$0x3]
    %1035 = vrot.lane.b32.xlu0 %v905, 48
    %v1036 = vpop.permute.xlu0 %1035
    %v1038 = vsel %vm63, %v1034, %v1036
    %v1039 = vld [vmem:[#allocation5] sm:$0xff]
    %v1040 = vld [vmem:[#allocation5 + $0x8] sm:$0xff]
    %v1041 = vld [vmem:[#allocation5 + $0x10] sm:$0xff]
    %v1042 = vld [vmem:[#allocation5 + $0x18] sm:$0xff]
    %v1043 = vld [vmem:[#allocation5 + $0x20] sm:$0xff]
    %v1044 = vld [vmem:[#allocation5 + $0x28] sm:$0xff]
    %v1045 = vld [vmem:[%s2] sm:$0x1]
    %v1047 = vlaneseq
    %v1048 = vshrl.u32 %v1047, 7
    %v1049 = vsub.s32 0, %v1048
    %v1050 = vrot.slane %v1045, %v1049
    %v1053 = vsel %vm78, %v1038, 0
    %1055 = vmatprep.subr.mxu0 0.0
    %1056 = vmatpush1.msra.mxu0 0.0
    %1057 = vmatprep.subr.mxu0 0.0
    %1058 = vmatpush1.msra.mxu0 0.0
    %1059 = vmatprep.subr.mxu0 0.0
    %1060 = vmatpush1.msra.mxu0 0.0
    %1061 = vmatprep.subr.mxu0 0.0
    %1062 = vmatpush1.msra.mxu0 0.0
    %1063 = vmatprep.subr.mxu0 0.0
    %1064 = vmatpush1.msra.mxu0 0.0
    %1065 = vmatprep.subr.mxu0 0.0
    %1066 = vmatpush1.msra.mxu0 0.0
    %1067 = vmatprep.subr.mxu0 0.0
    %1068 = vmatpush1.msra.mxu0 0.0
    %1069 = vmatprep.subr.mxu0 0.0
    %1070 = vmatpush1.msra.mxu0 0.0
    %1071 = vmatprep.subr.mxu0 0.0
    %1072 = vmatpush1.msra.mxu0 0.0
    %1073 = vmatprep.subr.mxu0 0.0
    %1074 = vmatpush1.msra.mxu0 0.0
    %1075 = vmatprep.subr.mxu0 0.0
    %1076 = vmatpush1.msra.mxu0 %v1044
    %1077 = vmatprep.subr.mxu0 0.0
    %1078 = vmatpush1.msra.mxu0 %v1043
    %1079 = vmatprep.subr.mxu0 0.0
    %1080 = vmatpush1.msra.mxu0 %v1042
    %1081 = vmatprep.subr.mxu0 0.0
    %1082 = vmatpush1.msra.mxu0 %v1041
    %1083 = vmatprep.subr.mxu0 0.0
    %1084 = vmatpush1.msra.mxu0 %v1040
    %1085 = vmatprep.subr.mxu0 0.0
    %1086 = vmatpush1.msra.mxu0 %v1039
    %1087 = vmatprep.subr.mxu0 0.0
    %1088 = vmatpush2.msra.mxu0 0.0
    %1089 = vmatprep.subr.mxu0 0.0
    %1090 = vmatpush2.msra.mxu0 0.0
    %1091 = vmatprep.subr.mxu0 0.0
    %1092 = vmatpush2.msra.mxu0 0.0
    %1093 = vmatprep.subr.mxu0 0.0
    %1094 = vmatpush2.msra.mxu0 0.0
    %1095 = vmatprep.subr.mxu0 0.0
    %1096 = vmatpush2.msra.mxu0 0.0
    %1097 = vmatprep.subr.mxu0 0.0
    %1098 = vmatpush2.msra.mxu0 0.0
    %1099 = vmatprep.subr.mxu0 0.0
    %1100 = vmatpush2.msra.mxu0 0.0
    %1101 = vmatprep.subr.mxu0 0.0
    %1102 = vmatpush2.msra.mxu0 0.0
    %1103 = vmatprep.subr.mxu0 0.0
    %1104 = vmatpush2.msra.mxu0 0.0
    %1105 = vmatprep.subr.mxu0 0.0
    %1106 = vmatpush2.msra.mxu0 0.0
    %1107 = vmatprep.subr.mxu0 0.0
    %1108 = vmatpush2.msra.mxu0 0.0
    %1109 = vmatprep.subr.mxu0 0.0
    %1110 = vmatpush2.msra.mxu0 0.0
    %1111 = vmatprep.subr.mxu0 0.0
    %1112 = vmatpush2.msra.mxu0 0.0
    %1113 = vmatprep.subr.mxu0 0.0
    %1114 = vmatpush2.msra.mxu0 0.0
    %1115 = vmatprep.subr.mxu0 0.0
    %1116 = vmatpush2.msra.mxu0 0.0
    %1117 = vmatprep.subr.mxu0 0.0
    %1118 = vmatpush2.msra.mxu0 0.0
    %1119 = vmatprep.mubr.f32.mxu0 0.0
    %1120 = vmatmul.mubr.f32.gmra.mxu0 %v1053
    %v1121 = vpop.f32.mrf.mxu0
    %v1122 = vadd.f32 %v1050, %v1121
    %v1123 = vpop.f32.mrf.mxu0
    %1124 = vdwg.mxu0
    %v1125 = vxor.u32 %v1122, 2147483648
    %v1126 = vmul.f32 %v1125, 1.442695
    %v1127 = vpow.pop %v1126
    %v1128 = vadd.f32 %v1127, 1.0
    %v1129 = vrcp.pop %v1128
    %v1130 = vmul.f32 1.0, %v1129
    %v1131 = vtanh.pop %v1122
    %v1132 = vmul.f32 %v1130, %v899
    %1134 = vrot.lane.b32.xlu0 %v1131, 64
    %v1135 = vpop.permute.xlu0 %1134
    %v1137 = vmul.f32 %v1130, %v1135
    %1139 = vrot.lane.b32.xlu0 %v1137, 32
    %v1140 = vpop.permute.xlu0 %1139
    %v1142 = vadd.f32 %v1132, %v1140
    %v1143 = vtanh.pop %v1142
    %1145 = vrot.lane.b32.xlu0 %v1143, 64
    %v1146 = vpop.permute.xlu0 %1145
    %v1148 = vmul.f32 %v1130, %v1146
    %1150 = vrot.lane.b32.xlu0 %v1148, 32
    %v1151 = vpop.permute.xlu0 %1150
    %1153 = vst.msk [vmem:[%s1032] sm:$0x3] %vm180, %v1151
    %v1154 = vld [vmem:[%s790] sm:$0x3]
    %1155 = vrot.lane.b32.xlu0 %v1027, 48
    %v1156 = vpop.permute.xlu0 %1155
    %v1158 = vsel %vm63, %v1154, %v1156
    %v1159 = vld [vmem:[#allocation7] sm:$0xff]
    %v1160 = vld [vmem:[#allocation7 + $0x8] sm:$0xff]
    %v1161 = vld [vmem:[#allocation7 + $0x10] sm:$0xff]
    %v1162 = vld [vmem:[#allocation7 + $0x18] sm:$0xff]
    %v1163 = vld [vmem:[#allocation7 + $0x20] sm:$0xff]
    %v1164 = vld [vmem:[#allocation7 + $0x28] sm:$0xff]
    %v1165 = vld [vmem:[%s4] sm:$0x1]
    %v1167 = vlaneseq
    %v1168 = vshrl.u32 %v1167, 7
    %v1169 = vsub.s32 0, %v1168
    %v1170 = vrot.slane %v1165, %v1169
    %v1173 = vsel %vm78, %v1158, 0
    %1175 = vmatprep.subr.mxu0 0.0
    %1176 = vmatpush1.msra.mxu0 0.0
    %1177 = vmatprep.subr.mxu0 0.0
    %1178 = vmatpush1.msra.mxu0 0.0
    %1179 = vmatprep.subr.mxu0 0.0
    %1180 = vmatpush1.msra.mxu0 0.0
    %1181 = vmatprep.subr.mxu0 0.0
    %1182 = vmatpush1.msra.mxu0 0.0
    %1183 = vmatprep.subr.mxu0 0.0
    %1184 = vmatpush1.msra.mxu0 0.0
    %1185 = vmatprep.subr.mxu0 0.0
    %1186 = vmatpush1.msra.mxu0 0.0
    %1187 = vmatprep.subr.mxu0 0.0
    %1188 = vmatpush1.msra.mxu0 0.0
    %1189 = vmatprep.subr.mxu0 0.0
    %1190 = vmatpush1.msra.mxu0 0.0
    %1191 = vmatprep.subr.mxu0 0.0
    %1192 = vmatpush1.msra.mxu0 0.0
    %1193 = vmatprep.subr.mxu0 0.0
    %1194 = vmatpush1.msra.mxu0 0.0
    %1195 = vmatprep.subr.mxu0 0.0
    %1196 = vmatpush1.msra.mxu0 %v1164
    %1197 = vmatprep.subr.mxu0 0.0
    %1198 = vmatpush1.msra.mxu0 %v1163
    %1199 = vmatprep.subr.mxu0 0.0
    %1200 = vmatpush1.msra.mxu0 %v1162
    %1201 = vmatprep.subr.mxu0 0.0
    %1202 = vmatpush1.msra.mxu0 %v1161
    %1203 = vmatprep.subr.mxu0 0.0
    %1204 = vmatpush1.msra.mxu0 %v1160
    %1205 = vmatprep.subr.mxu0 0.0
    %1206 = vmatpush1.msra.mxu0 %v1159
    %1207 = vmatprep.subr.mxu0 0.0
    %1208 = vmatpush2.msra.mxu0 0.0
    %1209 = vmatprep.subr.mxu0 0.0
    %1210 = vmatpush2.msra.mxu0 0.0
    %1211 = vmatprep.subr.mxu0 0.0
    %1212 = vmatpush2.msra.mxu0 0.0
    %1213 = vmatprep.subr.mxu0 0.0
    %1214 = vmatpush2.msra.mxu0 0.0
    %1215 = vmatprep.subr.mxu0 0.0
    %1216 = vmatpush2.msra.mxu0 0.0
    %1217 = vmatprep.subr.mxu0 0.0
    %1218 = vmatpush2.msra.mxu0 0.0
    %1219 = vmatprep.subr.mxu0 0.0
    %1220 = vmatpush2.msra.mxu0 0.0
    %1221 = vmatprep.subr.mxu0 0.0
    %1222 = vmatpush2.msra.mxu0 0.0
    %1223 = vmatprep.subr.mxu0 0.0
    %1224 = vmatpush2.msra.mxu0 0.0
    %1225 = vmatprep.subr.mxu0 0.0
    %1226 = vmatpush2.msra.mxu0 0.0
    %1227 = vmatprep.subr.mxu0 0.0
    %1228 = vmatpush2.msra.mxu0 0.0
    %1229 = vmatprep.subr.mxu0 0.0
    %1230 = vmatpush2.msra.mxu0 0.0
    %1231 = vmatprep.subr.mxu0 0.0
    %1232 = vmatpush2.msra.mxu0 0.0
    %1233 = vmatprep.subr.mxu0 0.0
    %1234 = vmatpush2.msra.mxu0 0.0
    %1235 = vmatprep.subr.mxu0 0.0
    %1236 = vmatpush2.msra.mxu0 0.0
    %1237 = vmatprep.subr.mxu0 0.0
    %1238 = vmatpush2.msra.mxu0 0.0
    %1239 = vmatprep.mubr.f32.mxu0 0.0
    %1240 = vmatmul.mubr.f32.gmra.mxu0 %v1173
    %v1241 = vpop.f32.mrf.mxu0
    %v1242 = vadd.f32 %v1170, %v1241
    %v1243 = vpop.f32.mrf.mxu0
    %1244 = vdwg.mxu0
    %v1245 = vxor.u32 %v1242, 2147483648
    %v1246 = vmul.f32 %v1245, 1.442695
    %v1247 = vpow.pop %v1246
    %v1248 = vadd.f32 %v1247, 1.0
    %v1249 = vrcp.pop %v1248
    %v1250 = vmul.f32 1.0, %v1249
    %v1251 = vtanh.pop %v1242
    %v1252 = vmul.f32 %v1250, %v1021
    %1254 = vrot.lane.b32.xlu0 %v1251, 64
    %v1255 = vpop.permute.xlu0 %1254
    %v1257 = vmul.f32 %v1250, %v1255
    %1259 = vrot.lane.b32.xlu0 %v1257, 32
    %v1260 = vpop.permute.xlu0 %1259
    %v1262 = vadd.f32 %v1252, %v1260
    %v1263 = vtanh.pop %v1262
    %1265 = vrot.lane.b32.xlu0 %v1263, 64
    %v1266 = vpop.permute.xlu0 %1265
    %v1268 = vmul.f32 %v1250, %v1266
    %1270 = vrot.lane.b32.xlu0 %v1268, 64
    %v1271 = vpop.permute.xlu0 %1270
    %1273 = vst.msk [vmem:[%s910] sm:$0x3] %vm300, %v1271
    %v1274 = vld [vmem:[%s668] sm:$0x3]
    %1275 = vrot.lane.b32.xlu0 %v1148, 48
    %v1276 = vpop.permute.xlu0 %1275
    %v1278 = vsel %vm63, %v1274, %v1276
    %v1279 = vld [vmem:[#allocation5] sm:$0xff]
    %v1280 = vld [vmem:[#allocation5 + $0x8] sm:$0xff]
    %v1281 = vld [vmem:[#allocation5 + $0x10] sm:$0xff]
    %v1282 = vld [vmem:[#allocation5 + $0x18] sm:$0xff]
    %v1283 = vld [vmem:[#allocation5 + $0x20] sm:$0xff]
    %v1284 = vld [vmem:[#allocation5 + $0x28] sm:$0xff]
    %v1285 = vld [vmem:[%s2] sm:$0x1]
    %v1287 = vlaneseq
    %v1288 = vshrl.u32 %v1287, 7
    %v1289 = vsub.s32 0, %v1288
    %v1290 = vrot.slane %v1285, %v1289
    %v1293 = vsel %vm78, %v1278, 0
    %1295 = vmatprep.subr.mxu0 0.0
    %1296 = vmatpush1.msra.mxu0 0.0
    %1297 = vmatprep.subr.mxu0 0.0
    %1298 = vmatpush1.msra.mxu0 0.0
    %1299 = vmatprep.subr.mxu0 0.0
    %1300 = vmatpush1.msra.mxu0 0.0
    %1301 = vmatprep.subr.mxu0 0.0
    %1302 = vmatpush1.msra.mxu0 0.0
    %1303 = vmatprep.subr.mxu0 0.0
    %1304 = vmatpush1.msra.mxu0 0.0
    %1305 = vmatprep.subr.mxu0 0.0
    %1306 = vmatpush1.msra.mxu0 0.0
    %1307 = vmatprep.subr.mxu0 0.0
    %1308 = vmatpush1.msra.mxu0 0.0
    %1309 = vmatprep.subr.mxu0 0.0
    %1310 = vmatpush1.msra.mxu0 0.0
    %1311 = vmatprep.subr.mxu0 0.0
    %1312 = vmatpush1.msra.mxu0 0.0
    %1313 = vmatprep.subr.mxu0 0.0
    %1314 = vmatpush1.msra.mxu0 0.0
    %1315 = vmatprep.subr.mxu0 0.0
    %1316 = vmatpush1.msra.mxu0 %v1284
    %1317 = vmatprep.subr.mxu0 0.0
    %1318 = vmatpush1.msra.mxu0 %v1283
    %1319 = vmatprep.subr.mxu0 0.0
    %1320 = vmatpush1.msra.mxu0 %v1282
    %1321 = vmatprep.subr.mxu0 0.0
    %1322 = vmatpush1.msra.mxu0 %v1281
    %1323 = vmatprep.subr.mxu0 0.0
    %1324 = vmatpush1.msra.mxu0 %v1280
    %1325 = vmatprep.subr.mxu0 0.0
    %1326 = vmatpush1.msra.mxu0 %v1279
    %1327 = vmatprep.subr.mxu0 0.0
    %1328 = vmatpush2.msra.mxu0 0.0
    %1329 = vmatprep.subr.mxu0 0.0
    %1330 = vmatpush2.msra.mxu0 0.0
    %1331 = vmatprep.subr.mxu0 0.0
    %1332 = vmatpush2.msra.mxu0 0.0
    %1333 = vmatprep.subr.mxu0 0.0
    %1334 = vmatpush2.msra.mxu0 0.0
    %1335 = vmatprep.subr.mxu0 0.0
    %1336 = vmatpush2.msra.mxu0 0.0
    %1337 = vmatprep.subr.mxu0 0.0
    %1338 = vmatpush2.msra.mxu0 0.0
    %1339 = vmatprep.subr.mxu0 0.0
    %1340 = vmatpush2.msra.mxu0 0.0
    %1341 = vmatprep.subr.mxu0 0.0
    %1342 = vmatpush2.msra.mxu0 0.0
    %1343 = vmatprep.subr.mxu0 0.0
    %1344 = vmatpush2.msra.mxu0 0.0
    %1345 = vmatprep.subr.mxu0 0.0
    %1346 = vmatpush2.msra.mxu0 0.0
    %1347 = vmatprep.subr.mxu0 0.0
    %1348 = vmatpush2.msra.mxu0 0.0
    %1349 = vmatprep.subr.mxu0 0.0
    %1350 = vmatpush2.msra.mxu0 0.0
    %1351 = vmatprep.subr.mxu0 0.0
    %1352 = vmatpush2.msra.mxu0 0.0
    %1353 = vmatprep.subr.mxu0 0.0
    %1354 = vmatpush2.msra.mxu0 0.0
    %1355 = vmatprep.subr.mxu0 0.0
    %1356 = vmatpush2.msra.mxu0 0.0
    %1357 = vmatprep.subr.mxu0 0.0
    %1358 = vmatpush2.msra.mxu0 0.0
    %1359 = vmatprep.mubr.f32.mxu0 0.0
    %1360 = vmatmul.mubr.f32.gmra.mxu0 %v1293
    %v1361 = vpop.f32.mrf.mxu0
    %v1362 = vadd.f32 %v1290, %v1361
    %v1363 = vpop.f32.mrf.mxu0
    %1364 = vdwg.mxu0
    %v1365 = vxor.u32 %v1362, 2147483648
    %v1366 = vmul.f32 %v1365, 1.442695
    %v1367 = vpow.pop %v1366
    %v1368 = vadd.f32 %v1367, 1.0
    %v1369 = vrcp.pop %v1368
    %v1370 = vmul.f32 1.0, %v1369
    %v1371 = vtanh.pop %v1362
    %v1372 = vmul.f32 %v1370, %v1142
    %1374 = vrot.lane.b32.xlu0 %v1371, 64
    %v1375 = vpop.permute.xlu0 %1374
    %v1377 = vmul.f32 %v1370, %v1375
    %1379 = vrot.lane.b32.xlu0 %v1377, 32
    %v1380 = vpop.permute.xlu0 %1379
    %v1382 = vadd.f32 %v1372, %v1380
    %v1383 = vtanh.pop %v1382
    %1385 = vrot.lane.b32.xlu0 %v1383, 64
    %v1386 = vpop.permute.xlu0 %1385
    %v1388 = vmul.f32 %v1370, %v1386
    %1390 = vrot.lane.b32.xlu0 %v1388, 32
    %v1391 = vpop.permute.xlu0 %1390
    %1393 = vst.msk [vmem:[%s788] sm:$0x3] %vm180, %v1391
    %v1394 = vld [vmem:[%s546] sm:$0x3]
    %1395 = vrot.lane.b32.xlu0 %v1268, 48
    %v1396 = vpop.permute.xlu0 %1395
    %v1398 = vsel %vm63, %v1394, %v1396
    %v1399 = vld [vmem:[#allocation7] sm:$0xff]
    %v1400 = vld [vmem:[#allocation7 + $0x8] sm:$0xff]
    %v1401 = vld [vmem:[#allocation7 + $0x10] sm:$0xff]
    %v1402 = vld [vmem:[#allocation7 + $0x18] sm:$0xff]
    %v1403 = vld [vmem:[#allocation7 + $0x20] sm:$0xff]
    %v1404 = vld [vmem:[#allocation7 + $0x28] sm:$0xff]
    %v1405 = vld [vmem:[%s4] sm:$0x1]
    %v1407 = vlaneseq
    %v1408 = vshrl.u32 %v1407, 7
    %v1409 = vsub.s32 0, %v1408
    %v1410 = vrot.slane %v1405, %v1409
    %v1413 = vsel %vm78, %v1398, 0
    %1415 = vmatprep.subr.mxu0 0.0
    %1416 = vmatpush1.msra.mxu0 0.0
    %1417 = vmatprep.subr.mxu0 0.0
    %1418 = vmatpush1.msra.mxu0 0.0
    %1419 = vmatprep.subr.mxu0 0.0
    %1420 = vmatpush1.msra.mxu0 0.0
    %1421 = vmatprep.subr.mxu0 0.0
    %1422 = vmatpush1.msra.mxu0 0.0
    %1423 = vmatprep.subr.mxu0 0.0
    %1424 = vmatpush1.msra.mxu0 0.0
    %1425 = vmatprep.subr.mxu0 0.0
    %1426 = vmatpush1.msra.mxu0 0.0
    %1427 = vmatprep.subr.mxu0 0.0
    %1428 = vmatpush1.msra.mxu0 0.0
    %1429 = vmatprep.subr.mxu0 0.0
    %1430 = vmatpush1.msra.mxu0 0.0
    %1431 = vmatprep.subr.mxu0 0.0
    %1432 = vmatpush1.msra.mxu0 0.0
    %1433 = vmatprep.subr.mxu0 0.0
    %1434 = vmatpush1.msra.mxu0 0.0
    %1435 = vmatprep.subr.mxu0 0.0
    %1436 = vmatpush1.msra.mxu0 %v1404
    %1437 = vmatprep.subr.mxu0 0.0
    %1438 = vmatpush1.msra.mxu0 %v1403
    %1439 = vmatprep.subr.mxu0 0.0
    %1440 = vmatpush1.msra.mxu0 %v1402
    %1441 = vmatprep.subr.mxu0 0.0
    %1442 = vmatpush1.msra.mxu0 %v1401
    %1443 = vmatprep.subr.mxu0 0.0
    %1444 = vmatpush1.msra.mxu0 %v1400
    %1445 = vmatprep.subr.mxu0 0.0
    %1446 = vmatpush1.msra.mxu0 %v1399
    %1447 = vmatprep.subr.mxu0 0.0
    %1448 = vmatpush2.msra.mxu0 0.0
    %1449 = vmatprep.subr.mxu0 0.0
    %1450 = vmatpush2.msra.mxu0 0.0
    %1451 = vmatprep.subr.mxu0 0.0
    %1452 = vmatpush2.msra.mxu0 0.0
    %1453 = vmatprep.subr.mxu0 0.0
    %1454 = vmatpush2.msra.mxu0 0.0
    %1455 = vmatprep.subr.mxu0 0.0
    %1456 = vmatpush2.msra.mxu0 0.0
    %1457 = vmatprep.subr.mxu0 0.0
    %1458 = vmatpush2.msra.mxu0 0.0
    %1459 = vmatprep.subr.mxu0 0.0
    %1460 = vmatpush2.msra.mxu0 0.0
    %1461 = vmatprep.subr.mxu0 0.0
    %1462 = vmatpush2.msra.mxu0 0.0
    %1463 = vmatprep.subr.mxu0 0.0
    %1464 = vmatpush2.msra.mxu0 0.0
    %1465 = vmatprep.subr.mxu0 0.0
    %1466 = vmatpush2.msra.mxu0 0.0
    %1467 = vmatprep.subr.mxu0 0.0
    %1468 = vmatpush2.msra.mxu0 0.0
    %1469 = vmatprep.subr.mxu0 0.0
    %1470 = vmatpush2.msra.mxu0 0.0
    %1471 = vmatprep.subr.mxu0 0.0
    %1472 = vmatpush2.msra.mxu0 0.0
    %1473 = vmatprep.subr.mxu0 0.0
    %1474 = vmatpush2.msra.mxu0 0.0
    %1475 = vmatprep.subr.mxu0 0.0
    %1476 = vmatpush2.msra.mxu0 0.0
    %1477 = vmatprep.subr.mxu0 0.0
    %1478 = vmatpush2.msra.mxu0 0.0
    %1479 = vmatprep.mubr.f32.mxu0 0.0
    %1480 = vmatmul.mubr.f32.gmra.mxu0 %v1413
    %v1481 = vpop.f32.mrf.mxu0
    %v1482 = vadd.f32 %v1410, %v1481
    %v1483 = vpop.f32.mrf.mxu0
    %1484 = vdwg.mxu0
    %v1485 = vxor.u32 %v1482, 2147483648
    %v1486 = vmul.f32 %v1485, 1.442695
    %v1487 = vpow.pop %v1486
    %v1488 = vadd.f32 %v1487, 1.0
    %v1489 = vrcp.pop %v1488
    %v1490 = vmul.f32 1.0, %v1489
    %v1491 = vtanh.pop %v1482
    %v1492 = vmul.f32 %v1490, %v1262
    %1494 = vrot.lane.b32.xlu0 %v1491, 64
    %v1495 = vpop.permute.xlu0 %1494
    %v1497 = vmul.f32 %v1490, %v1495
    %1499 = vrot.lane.b32.xlu0 %v1497, 32
    %v1500 = vpop.permute.xlu0 %1499
    %v1502 = vadd.f32 %v1492, %v1500
    %v1503 = vtanh.pop %v1502
    %1505 = vrot.lane.b32.xlu0 %v1503, 64
    %v1506 = vpop.permute.xlu0 %1505
    %v1508 = vmul.f32 %v1490, %v1506
    %1510 = vrot.lane.b32.xlu0 %v1508, 64
    %v1511 = vpop.permute.xlu0 %1510
    %1513 = vst.msk [vmem:[%s666] sm:$0x3] %vm300, %v1511
    %v1514 = vld [vmem:[%s424] sm:$0x3]
    %1515 = vrot.lane.b32.xlu0 %v1388, 48
    %v1516 = vpop.permute.xlu0 %1515
    %v1518 = vsel %vm63, %v1514, %v1516
    %v1519 = vld [vmem:[#allocation5] sm:$0xff]
    %v1520 = vld [vmem:[#allocation5 + $0x8] sm:$0xff]
    %v1521 = vld [vmem:[#allocation5 + $0x10] sm:$0xff]
    %v1522 = vld [vmem:[#allocation5 + $0x18] sm:$0xff]
    %v1523 = vld [vmem:[#allocation5 + $0x20] sm:$0xff]
    %v1524 = vld [vmem:[#allocation5 + $0x28] sm:$0xff]
    %v1525 = vld [vmem:[%s2] sm:$0x1]
    %v1527 = vlaneseq
    %v1528 = vshrl.u32 %v1527, 7
    %v1529 = vsub.s32 0, %v1528
    %v1530 = vrot.slane %v1525, %v1529
    %v1533 = vsel %vm78, %v1518, 0
    %1535 = vmatprep.subr.mxu0 0.0
    %1536 = vmatpush1.msra.mxu0 0.0
    %1537 = vmatprep.subr.mxu0 0.0
    %1538 = vmatpush1.msra.mxu0 0.0
    %1539 = vmatprep.subr.mxu0 0.0
    %1540 = vmatpush1.msra.mxu0 0.0
    %1541 = vmatprep.subr.mxu0 0.0
    %1542 = vmatpush1.msra.mxu0 0.0
    %1543 = vmatprep.subr.mxu0 0.0
    %1544 = vmatpush1.msra.mxu0 0.0
    %1545 = vmatprep.subr.mxu0 0.0
    %1546 = vmatpush1.msra.mxu0 0.0
    %1547 = vmatprep.subr.mxu0 0.0
    %1548 = vmatpush1.msra.mxu0 0.0
    %1549 = vmatprep.subr.mxu0 0.0
    %1550 = vmatpush1.msra.mxu0 0.0
    %1551 = vmatprep.subr.mxu0 0.0
    %1552 = vmatpush1.msra.mxu0 0.0
    %1553 = vmatprep.subr.mxu0 0.0
    %1554 = vmatpush1.msra.mxu0 0.0
    %1555 = vmatprep.subr.mxu0 0.0
    %1556 = vmatpush1.msra.mxu0 %v1524
    %1557 = vmatprep.subr.mxu0 0.0
    %1558 = vmatpush1.msra.mxu0 %v1523
    %1559 = vmatprep.subr.mxu0 0.0
    %1560 = vmatpush1.msra.mxu0 %v1522
    %1561 = vmatprep.subr.mxu0 0.0
    %1562 = vmatpush1.msra.mxu0 %v1521
    %1563 = vmatprep.subr.mxu0 0.0
    %1564 = vmatpush1.msra.mxu0 %v1520
    %1565 = vmatprep.subr.mxu0 0.0
    %1566 = vmatpush1.msra.mxu0 %v1519
    %1567 = vmatprep.subr.mxu0 0.0
    %1568 = vmatpush2.msra.mxu0 0.0
    %1569 = vmatprep.subr.mxu0 0.0
    %1570 = vmatpush2.msra.mxu0 0.0
    %1571 = vmatprep.subr.mxu0 0.0
    %1572 = vmatpush2.msra.mxu0 0.0
    %1573 = vmatprep.subr.mxu0 0.0
    %1574 = vmatpush2.msra.mxu0 0.0
    %1575 = vmatprep.subr.mxu0 0.0
    %1576 = vmatpush2.msra.mxu0 0.0
    %1577 = vmatprep.subr.mxu0 0.0
    %1578 = vmatpush2.msra.mxu0 0.0
    %1579 = vmatprep.subr.mxu0 0.0
    %1580 = vmatpush2.msra.mxu0 0.0
    %1581 = vmatprep.subr.mxu0 0.0
    %1582 = vmatpush2.msra.mxu0 0.0
    %1583 = vmatprep.subr.mxu0 0.0
    %1584 = vmatpush2.msra.mxu0 0.0
    %1585 = vmatprep.subr.mxu0 0.0
    %1586 = vmatpush2.msra.mxu0 0.0
    %1587 = vmatprep.subr.mxu0 0.0
    %1588 = vmatpush2.msra.mxu0 0.0
    %1589 = vmatprep.subr.mxu0 0.0
    %1590 = vmatpush2.msra.mxu0 0.0
    %1591 = vmatprep.subr.mxu0 0.0
    %1592 = vmatpush2.msra.mxu0 0.0
    %1593 = vmatprep.subr.mxu0 0.0
    %1594 = vmatpush2.msra.mxu0 0.0
    %1595 = vmatprep.subr.mxu0 0.0
    %1596 = vmatpush2.msra.mxu0 0.0
    %1597 = vmatprep.subr.mxu0 0.0
    %1598 = vmatpush2.msra.mxu0 0.0
    %1599 = vmatprep.mubr.f32.mxu0 0.0
    %1600 = vmatmul.mubr.f32.gmra.mxu0 %v1533
    %v1601 = vpop.f32.mrf.mxu0
    %v1602 = vadd.f32 %v1530, %v1601
    %v1603 = vpop.f32.mrf.mxu0
    %1604 = vdwg.mxu0
    %v1605 = vxor.u32 %v1602, 2147483648
    %v1606 = vmul.f32 %v1605, 1.442695
    %v1607 = vpow.pop %v1606
    %v1608 = vadd.f32 %v1607, 1.0
    %v1609 = vrcp.pop %v1608
    %v1610 = vmul.f32 1.0, %v1609
    %v1611 = vtanh.pop %v1602
    %v1612 = vmul.f32 %v1610, %v1382
    %1614 = vrot.lane.b32.xlu0 %v1611, 64
    %v1615 = vpop.permute.xlu0 %1614
    %v1617 = vmul.f32 %v1610, %v1615
    %1619 = vrot.lane.b32.xlu0 %v1617, 32
    %v1620 = vpop.permute.xlu0 %1619
    %v1622 = vadd.f32 %v1612, %v1620
    %v1623 = vtanh.pop %v1622
    %1625 = vrot.lane.b32.xlu0 %v1623, 64
    %v1626 = vpop.permute.xlu0 %1625
    %v1628 = vmul.f32 %v1610, %v1626
    %1630 = vrot.lane.b32.xlu0 %v1628, 32
    %v1631 = vpop.permute.xlu0 %1630
    %1633 = vst.msk [vmem:[%s544] sm:$0x3] %vm180, %v1631
    %v1634 = vld [vmem:[%s302] sm:$0x3]
    %1635 = vrot.lane.b32.xlu0 %v1508, 48
    %v1636 = vpop.permute.xlu0 %1635
    %v1638 = vsel %vm63, %v1634, %v1636
    %v1639 = vld [vmem:[#allocation7] sm:$0xff]
    %v1640 = vld [vmem:[#allocation7 + $0x8] sm:$0xff]
    %v1641 = vld [vmem:[#allocation7 + $0x10] sm:$0xff]
    %v1642 = vld [vmem:[#allocation7 + $0x18] sm:$0xff]
    %v1643 = vld [vmem:[#allocation7 + $0x20] sm:$0xff]
    %v1644 = vld [vmem:[#allocation7 + $0x28] sm:$0xff]
    %v1645 = vld [vmem:[%s4] sm:$0x1]
    %v1647 = vlaneseq
    %v1648 = vshrl.u32 %v1647, 7
    %v1649 = vsub.s32 0, %v1648
    %v1650 = vrot.slane %v1645, %v1649
    %v1653 = vsel %vm78, %v1638, 0
    %1655 = vmatprep.subr.mxu0 0.0
    %1656 = vmatpush1.msra.mxu0 0.0
    %1657 = vmatprep.subr.mxu0 0.0
    %1658 = vmatpush1.msra.mxu0 0.0
    %1659 = vmatprep.subr.mxu0 0.0
    %1660 = vmatpush1.msra.mxu0 0.0
    %1661 = vmatprep.subr.mxu0 0.0
    %1662 = vmatpush1.msra.mxu0 0.0
    %1663 = vmatprep.subr.mxu0 0.0
    %1664 = vmatpush1.msra.mxu0 0.0
    %1665 = vmatprep.subr.mxu0 0.0
    %1666 = vmatpush1.msra.mxu0 0.0
    %1667 = vmatprep.subr.mxu0 0.0
    %1668 = vmatpush1.msra.mxu0 0.0
    %1669 = vmatprep.subr.mxu0 0.0
    %1670 = vmatpush1.msra.mxu0 0.0
    %1671 = vmatprep.subr.mxu0 0.0
    %1672 = vmatpush1.msra.mxu0 0.0
    %1673 = vmatprep.subr.mxu0 0.0
    %1674 = vmatpush1.msra.mxu0 0.0
    %1675 = vmatprep.subr.mxu0 0.0
    %1676 = vmatpush1.msra.mxu0 %v1644
    %1677 = vmatprep.subr.mxu0 0.0
    %1678 = vmatpush1.msra.mxu0 %v1643
    %1679 = vmatprep.subr.mxu0 0.0
    %1680 = vmatpush1.msra.mxu0 %v1642
    %1681 = vmatprep.subr.mxu0 0.0
    %1682 = vmatpush1.msra.mxu0 %v1641
    %1683 = vmatprep.subr.mxu0 0.0
    %1684 = vmatpush1.msra.mxu0 %v1640
    %1685 = vmatprep.subr.mxu0 0.0
    %1686 = vmatpush1.msra.mxu0 %v1639
    %1687 = vmatprep.subr.mxu0 0.0
    %1688 = vmatpush2.msra.mxu0 0.0
    %1689 = vmatprep.subr.mxu0 0.0
    %1690 = vmatpush2.msra.mxu0 0.0
    %1691 = vmatprep.subr.mxu0 0.0
    %1692 = vmatpush2.msra.mxu0 0.0
    %1693 = vmatprep.subr.mxu0 0.0
    %1694 = vmatpush2.msra.mxu0 0.0
    %1695 = vmatprep.subr.mxu0 0.0
    %1696 = vmatpush2.msra.mxu0 0.0
    %1697 = vmatprep.subr.mxu0 0.0
    %1698 = vmatpush2.msra.mxu0 0.0
    %1699 = vmatprep.subr.mxu0 0.0
    %1700 = vmatpush2.msra.mxu0 0.0
    %1701 = vmatprep.subr.mxu0 0.0
    %1702 = vmatpush2.msra.mxu0 0.0
    %1703 = vmatprep.subr.mxu0 0.0
    %1704 = vmatpush2.msra.mxu0 0.0
    %1705 = vmatprep.subr.mxu0 0.0
    %1706 = vmatpush2.msra.mxu0 0.0
    %1707 = vmatprep.subr.mxu0 0.0
    %1708 = vmatpush2.msra.mxu0 0.0
    %1709 = vmatprep.subr.mxu0 0.0
    %1710 = vmatpush2.msra.mxu0 0.0
    %1711 = vmatprep.subr.mxu0 0.0
    %1712 = vmatpush2.msra.mxu0 0.0
    %1713 = vmatprep.subr.mxu0 0.0
    %1714 = vmatpush2.msra.mxu0 0.0
    %1715 = vmatprep.subr.mxu0 0.0
    %1716 = vmatpush2.msra.mxu0 0.0
    %1717 = vmatprep.subr.mxu0 0.0
    %1718 = vmatpush2.msra.mxu0 0.0
    %1719 = vmatprep.mubr.f32.mxu0 0.0
    %1720 = vmatmul.mubr.f32.gmra.mxu0 %v1653
    %v1721 = vpop.f32.mrf.mxu0
    %v1722 = vadd.f32 %v1650, %v1721
    %v1723 = vpop.f32.mrf.mxu0
    %1724 = vdwg.mxu0
    %v1725 = vxor.u32 %v1722, 2147483648
    %v1726 = vmul.f32 %v1725, 1.442695
    %v1727 = vpow.pop %v1726
    %v1728 = vadd.f32 %v1727, 1.0
    %v1729 = vrcp.pop %v1728
    %v1730 = vmul.f32 1.0, %v1729
    %v1731 = vtanh.pop %v1722
    %v1732 = vmul.f32 %v1730, %v1502
    %1734 = vrot.lane.b32.xlu0 %v1731, 64
    %v1735 = vpop.permute.xlu0 %1734
    %v1737 = vmul.f32 %v1730, %v1735
    %1739 = vrot.lane.b32.xlu0 %v1737, 32
    %v1740 = vpop.permute.xlu0 %1739
    %v1742 = vadd.f32 %v1732, %v1740
    %v1743 = vtanh.pop %v1742
    %1745 = vrot.lane.b32.xlu0 %v1743, 64
    %v1746 = vpop.permute.xlu0 %1745
    %v1748 = vmul.f32 %v1730, %v1746
    %1750 = vrot.lane.b32.xlu0 %v1748, 64
    %v1751 = vpop.permute.xlu0 %1750
    %1753 = vst.msk [vmem:[%s422] sm:$0x3] %vm300, %v1751
    %v1754 = vld [vmem:[%s182] sm:$0x3]
    %1755 = vrot.lane.b32.xlu0 %v1628, 48
    %v1756 = vpop.permute.xlu0 %1755
    %v1758 = vsel %vm63, %v1754, %v1756
    %v1759 = vld [vmem:[#allocation5] sm:$0xff]
    %v1760 = vld [vmem:[#allocation5 + $0x8] sm:$0xff]
    %v1761 = vld [vmem:[#allocation5 + $0x10] sm:$0xff]
    %v1762 = vld [vmem:[#allocation5 + $0x18] sm:$0xff]
    %v1763 = vld [vmem:[#allocation5 + $0x20] sm:$0xff]
    %v1764 = vld [vmem:[#allocation5 + $0x28] sm:$0xff]
    %v1765 = vld [vmem:[%s2] sm:$0x1]
    %v1767 = vlaneseq
    %v1768 = vshrl.u32 %v1767, 7
    %v1769 = vsub.s32 0, %v1768
    %v1770 = vrot.slane %v1765, %v1769
    %v1773 = vsel %vm78, %v1758, 0
    %1775 = vmatprep.subr.mxu0 0.0
    %1776 = vmatpush1.msra.mxu0 0.0
    %1777 = vmatprep.subr.mxu0 0.0
    %1778 = vmatpush1.msra.mxu0 0.0
    %1779 = vmatprep.subr.mxu0 0.0
    %1780 = vmatpush1.msra.mxu0 0.0
    %1781 = vmatprep.subr.mxu0 0.0
    %1782 = vmatpush1.msra.mxu0 0.0
    %1783 = vmatprep.subr.mxu0 0.0
    %1784 = vmatpush1.msra.mxu0 0.0
    %1785 = vmatprep.subr.mxu0 0.0
    %1786 = vmatpush1.msra.mxu0 0.0
    %1787 = vmatprep.subr.mxu0 0.0
    %1788 = vmatpush1.msra.mxu0 0.0
    %1789 = vmatprep.subr.mxu0 0.0
    %1790 = vmatpush1.msra.mxu0 0.0
    %1791 = vmatprep.subr.mxu0 0.0
    %1792 = vmatpush1.msra.mxu0 0.0
    %1793 = vmatprep.subr.mxu0 0.0
    %1794 = vmatpush1.msra.mxu0 0.0
    %1795 = vmatprep.subr.mxu0 0.0
    %1796 = vmatpush1.msra.mxu0 %v1764
    %1797 = vmatprep.subr.mxu0 0.0
    %1798 = vmatpush1.msra.mxu0 %v1763
    %1799 = vmatprep.subr.mxu0 0.0
    %1800 = vmatpush1.msra.mxu0 %v1762
    %1801 = vmatprep.subr.mxu0 0.0
    %1802 = vmatpush1.msra.mxu0 %v1761
    %1803 = vmatprep.subr.mxu0 0.0
    %1804 = vmatpush1.msra.mxu0 %v1760
    %1805 = vmatprep.subr.mxu0 0.0
    %1806 = vmatpush1.msra.mxu0 %v1759
    %1807 = vmatprep.subr.mxu0 0.0
    %1808 = vmatpush2.msra.mxu0 0.0
    %1809 = vmatprep.subr.mxu0 0.0
    %1810 = vmatpush2.msra.mxu0 0.0
    %1811 = vmatprep.subr.mxu0 0.0
    %1812 = vmatpush2.msra.mxu0 0.0
    %1813 = vmatprep.subr.mxu0 0.0
    %1814 = vmatpush2.msra.mxu0 0.0
    %1815 = vmatprep.subr.mxu0 0.0
    %1816 = vmatpush2.msra.mxu0 0.0
    %1817 = vmatprep.subr.mxu0 0.0
    %1818 = vmatpush2.msra.mxu0 0.0
    %1819 = vmatprep.subr.mxu0 0.0
    %1820 = vmatpush2.msra.mxu0 0.0
    %1821 = vmatprep.subr.mxu0 0.0
    %1822 = vmatpush2.msra.mxu0 0.0
    %1823 = vmatprep.subr.mxu0 0.0
    %1824 = vmatpush2.msra.mxu0 0.0
    %1825 = vmatprep.subr.mxu0 0.0
    %1826 = vmatpush2.msra.mxu0 0.0
    %1827 = vmatprep.subr.mxu0 0.0
    %1828 = vmatpush2.msra.mxu0 0.0
    %1829 = vmatprep.subr.mxu0 0.0
    %1830 = vmatpush2.msra.mxu0 0.0
    %1831 = vmatprep.subr.mxu0 0.0
    %1832 = vmatpush2.msra.mxu0 0.0
    %1833 = vmatprep.subr.mxu0 0.0
    %1834 = vmatpush2.msra.mxu0 0.0
    %1835 = vmatprep.subr.mxu0 0.0
    %1836 = vmatpush2.msra.mxu0 0.0
    %1837 = vmatprep.subr.mxu0 0.0
    %1838 = vmatpush2.msra.mxu0 0.0
    %1839 = vmatprep.mubr.f32.mxu0 0.0
    %1840 = vmatmul.mubr.f32.gmra.mxu0 %v1773
    %v1841 = vpop.f32.mrf.mxu0
    %v1842 = vadd.f32 %v1770, %v1841
    %v1843 = vpop.f32.mrf.mxu0
    %1844 = vdwg.mxu0
    %v1845 = vxor.u32 %v1842, 2147483648
    %v1846 = vmul.f32 %v1845, 1.442695
    %v1847 = vpow.pop %v1846
    %v1848 = vadd.f32 %v1847, 1.0
    %v1849 = vrcp.pop %v1848
    %v1850 = vmul.f32 1.0, %v1849
    %v1851 = vtanh.pop %v1842
    %v1852 = vmul.f32 %v1850, %v1622
    %1854 = vrot.lane.b32.xlu0 %v1851, 64
    %v1855 = vpop.permute.xlu0 %1854
    %v1857 = vmul.f32 %v1850, %v1855
    %1859 = vrot.lane.b32.xlu0 %v1857, 32
    %v1860 = vpop.permute.xlu0 %1859
    %v1862 = vadd.f32 %v1852, %v1860
    %v1863 = vtanh.pop %v1862
    %1865 = vrot.lane.b32.xlu0 %v1863, 64
    %v1866 = vpop.permute.xlu0 %1865
    %v1868 = vmul.f32 %v1850, %v1866
    %1870 = vrot.lane.b32.xlu0 %v1868, 32
    %v1871 = vpop.permute.xlu0 %1870
    %1873 = vst.msk [vmem:[%s299] sm:$0x3] %vm180, %v1871
    %v1874 = vld [vmem:[#allocation2] sm:$0x3]
    %1875 = vrot.lane.b32.xlu0 %v1748, 48
    %v1876 = vpop.permute.xlu0 %1875
    %v1878 = vsel %vm63, %v1874, %v1876
    %v1879 = vld [vmem:[#allocation7] sm:$0xff]
    %v1880 = vld [vmem:[#allocation7 + $0x8] sm:$0xff]
    %v1881 = vld [vmem:[#allocation7 + $0x10] sm:$0xff]
    %v1882 = vld [vmem:[#allocation7 + $0x18] sm:$0xff]
    %v1883 = vld [vmem:[#allocation7 + $0x20] sm:$0xff]
    %v1884 = vld [vmem:[#allocation7 + $0x28] sm:$0xff]
    %v1885 = vld [vmem:[%s4] sm:$0x1]
    %v1887 = vlaneseq
    %v1888 = vshrl.u32 %v1887, 7
    %v1889 = vsub.s32 0, %v1888
    %v1890 = vrot.slane %v1885, %v1889
    %v1893 = vsel %vm78, %v1878, 0
    %1895 = vmatprep.subr.mxu0 0.0
    %1896 = vmatpush1.msra.mxu0 0.0
    %1897 = vmatprep.subr.mxu0 0.0
    %1898 = vmatpush1.msra.mxu0 0.0
    %1899 = vmatprep.subr.mxu0 0.0
    %1900 = vmatpush1.msra.mxu0 0.0
    %1901 = vmatprep.subr.mxu0 0.0
    %1902 = vmatpush1.msra.mxu0 0.0
    %1903 = vmatprep.subr.mxu0 0.0
    %1904 = vmatpush1.msra.mxu0 0.0
    %1905 = vmatprep.subr.mxu0 0.0
    %1906 = vmatpush1.msra.mxu0 0.0
    %1907 = vmatprep.subr.mxu0 0.0
    %1908 = vmatpush1.msra.mxu0 0.0
    %1909 = vmatprep.subr.mxu0 0.0
    %1910 = vmatpush1.msra.mxu0 0.0
    %1911 = vmatprep.subr.mxu0 0.0
    %1912 = vmatpush1.msra.mxu0 0.0
    %1913 = vmatprep.subr.mxu0 0.0
    %1914 = vmatpush1.msra.mxu0 0.0
    %1915 = vmatprep.subr.mxu0 0.0
    %1916 = vmatpush1.msra.mxu0 %v1884
    %1917 = vmatprep.subr.mxu0 0.0
    %1918 = vmatpush1.msra.mxu0 %v1883
    %1919 = vmatprep.subr.mxu0 0.0
    %1920 = vmatpush1.msra.mxu0 %v1882
    %1921 = vmatprep.subr.mxu0 0.0
    %1922 = vmatpush1.msra.mxu0 %v1881
    %1923 = vmatprep.subr.mxu0 0.0
    %1924 = vmatpush1.msra.mxu0 %v1880
    %1925 = vmatprep.subr.mxu0 0.0
    %1926 = vmatpush1.msra.mxu0 %v1879
    %1927 = vmatprep.subr.mxu0 0.0
    %1928 = vmatpush2.msra.mxu0 0.0
    %1929 = vmatprep.subr.mxu0 0.0
    %1930 = vmatpush2.msra.mxu0 0.0
    %1931 = vmatprep.subr.mxu0 0.0
    %1932 = vmatpush2.msra.mxu0 0.0
    %1933 = vmatprep.subr.mxu0 0.0
    %1934 = vmatpush2.msra.mxu0 0.0
    %1935 = vmatprep.subr.mxu0 0.0
    %1936 = vmatpush2.msra.mxu0 0.0
    %1937 = vmatprep.subr.mxu0 0.0
    %1938 = vmatpush2.msra.mxu0 0.0
    %1939 = vmatprep.subr.mxu0 0.0
    %1940 = vmatpush2.msra.mxu0 0.0
    %1941 = vmatprep.subr.mxu0 0.0
    %1942 = vmatpush2.msra.mxu0 0.0
    %1943 = vmatprep.subr.mxu0 0.0
    %1944 = vmatpush2.msra.mxu0 0.0
    %1945 = vmatprep.subr.mxu0 0.0
    %1946 = vmatpush2.msra.mxu0 0.0
    %1947 = vmatprep.subr.mxu0 0.0
    %1948 = vmatpush2.msra.mxu0 0.0
    %1949 = vmatprep.subr.mxu0 0.0
    %1950 = vmatpush2.msra.mxu0 0.0
    %1951 = vmatprep.subr.mxu0 0.0
    %1952 = vmatpush2.msra.mxu0 0.0
    %1953 = vmatprep.subr.mxu0 0.0
    %1954 = vmatpush2.msra.mxu0 0.0
    %1955 = vmatprep.subr.mxu0 0.0
    %1956 = vmatpush2.msra.mxu0 0.0
    %1957 = vmatprep.subr.mxu0 0.0
    %1958 = vmatpush2.msra.mxu0 0.0
    %1959 = vmatprep.mubr.f32.mxu0 0.0
    %1960 = vmatmul.mubr.f32.gmra.mxu0 %v1893
    %v1961 = vpop.f32.mrf.mxu0
    %v1962 = vadd.f32 %v1890, %v1961
    %v1963 = vpop.f32.mrf.mxu0
    %1964 = vdwg.mxu0
    %v1965 = vxor.u32 %v1962, 2147483648
    %v1966 = vmul.f32 %v1965, 1.442695
    %v1967 = vpow.pop %v1966
    %v1968 = vadd.f32 %v1967, 1.0
    %v1969 = vrcp.pop %v1968
    %v1970 = vmul.f32 1.0, %v1969
    %v1971 = vtanh.pop %v1962
    %v1972 = vmul.f32 %v1970, %v1742
    %1974 = vrot.lane.b32.xlu0 %v1971, 64
    %v1975 = vpop.permute.xlu0 %1974
    %v1977 = vmul.f32 %v1970, %v1975
    %1979 = vrot.lane.b32.xlu0 %v1977, 32
    %v1980 = vpop.permute.xlu0 %1979
    %v1982 = vadd.f32 %v1972, %v1980
    %v1983 = vtanh.pop %v1982
    %1985 = vrot.lane.b32.xlu0 %v1983, 64
    %v1986 = vpop.permute.xlu0 %1985
    %v1988 = vmul.f32 %v1970, %v1986
    %1990 = vrot.lane.b32.xlu0 %v1988, 64
    %v1991 = vpop.permute.xlu0 %1990
    %1993 = vst.msk [vmem:[#allocation8] sm:$0x3] %vm300, %v1991
    // Predicated region
    $region34: #{tpu_custom_call.1} parent=1 // pred_check
      _
    $region35: #{tpu_custom_call.1} parent=1 // pred_check_branch
      %1995 = sbr.rel (0) target = $region37
    $region36: #{tpu_custom_call.1} parent=1 // pred_region
      %s1997 = ssub.s32 256, 256
      %1998 = vsyncadd [#allocation4], %s1997
      %s1999 = sshll.u32 [#allocation8], 4
      %s2000 = int_to_ptr.vmem [resolvable:$true] %s1999
      %2005 = dma.vmem_to_hbm [thread:$0]  %s2000, 256, %s5, [#allocation4], 32, 32, 2
    $region37: #{tpu_custom_call.1} parent=1 // pred_fallthru
      _
    // Predicated region
    $region38: #{tpu_custom_call.1} parent=1 // pred_check
      _
    $region39: #{tpu_custom_call.1} parent=1 // pred_check_branch
      %2007 = sbr.rel (0) target = $region41
    $region40: #{tpu_custom_call.1} parent=1 // pred_region
      %2008 = dma.done [#allocation4], 256
    $region41: #{tpu_custom_call.1} parent=1 // pred_fallthru
      _
    %2009 = vsyncpa [#allocation3], 1
    %2010 = vsyncpa [#allocation6], 1
    %2011 = vsyncpa [#allocation4], 1

</llo_original>
